<compile_context>
chip_gen: v5e
topology: v5e:2x2
jax: 0.10.0
libtpu: 0.0.40
codegen_flags: <defaults>
</compile_context>

<pallas_src>
import functools

import jax
import jax.numpy as jnp
from jax import lax
from jax.experimental import pallas as pl
from jax.experimental.pallas import tpu as pltpu


def _anomaly_lstm_kernel(
    x_ref,      # (Tc*Bp, D)        time-major, batch-padded input chunk
    wf_ref,     # (D, G+AH+AP)      fused [lstm-gates | anomaly-hidden | mem-proj]
    bf_ref,     # (1, G+AH+AP)      fused biases
    whh_ref,    # (Hg, G)           recurrent weight, gates packed [i|f|g|o] @ 64 lanes
    aw2_ref,    # (1, AH)           anomaly_score[2] weight
    ab2_ref,    # (1, 1)            anomaly_score[2] bias
    dwh_ref,    # (1, Hg)           decoder weight acting on last hidden
    dwm_ref,    # (1, AP)           decoder weight acting on memory
    db_ref,     # (1, 1)            decoder bias
    out_ref,    # (Bp, 1)
    gx_scr,     # (Tc*Bp, G)        x-side LSTM gate pre-activations for this chunk
    h_scr,      # (Bp, Hg)          LSTM hidden carry
    c_scr,      # (Bp, Hg)          LSTM cell carry
    m_scr,      # (Bp, 1)           online-softmax running max
    l_scr,      # (Bp, 1)           online-softmax running denom
    acc_scr,    # (Bp, AP)          online-softmax weighted memory accumulator
    *,
    t_real,     # static: number of real (unpadded) time steps
):
    rows, _ = x_ref.shape
    Bp, Hg = h_scr.shape
    Tc = rows // Bp
    G = whh_ref.shape[1]            # 4 * Hg
    AH = aw2_ref.shape[1]
    AP = acc_scr.shape[1]
    needs_mask = (t_real % Tc) != 0  # static

    step = pl.program_id(0)
    n_steps = pl.num_programs(0)

    # ---- initialize carries on the first time chunk ----
    @pl.when(step == 0)
    def _init():
        h_scr[...] = jnp.zeros(h_scr.shape, jnp.float32)
        c_scr[...] = jnp.zeros(c_scr.shape, jnp.float32)
        m_scr[...] = jnp.full(m_scr.shape, -jnp.inf, jnp.float32)
        l_scr[...] = jnp.zeros(l_scr.shape, jnp.float32)
        acc_scr[...] = jnp.zeros(acc_scr.shape, jnp.float32)

    # ---- hoisted fused matmul: all x-only work for this chunk in one MXU pass ----
    fused = (jnp.dot(x_ref[...], wf_ref[...], preferred_element_type=jnp.float32)
             + bf_ref[...])                                   # (rows, G+AH+AP)
    gx_scr[...] = fused[:, :G]                                # only the gate columns hit VMEM

    # ---- anomaly branch + memory projection, consumed as live values ----
    h1 = jnp.maximum(fused[:, G:G + AH], 0.0).reshape(Tc, Bp, AH)
    proj = fused[:, G + AH:G + AH + AP].reshape(Tc, Bp, AP)
    logit = jnp.sum(h1 * aw2_ref[...], axis=-1, keepdims=True) + ab2_ref[...]
    score = jax.nn.sigmoid(logit)                             # (Tc, Bp, 1)
    if needs_mask:
        t_idx = lax.broadcasted_iota(jnp.int32, (Tc, 1, 1), 0)
        valid_t = (step * Tc + t_idx) < t_real
        score = jnp.where(valid_t, score, -jnp.inf)           # padded steps drop out exactly

    # block-wise online softmax merge across chunks (exact)
    m_prev = m_scr[...]
    m_new = jnp.maximum(m_prev, jnp.max(score, axis=0))       # (Bp, 1)
    corr = jnp.exp(m_prev - m_new)
    w_exp = jnp.exp(score - m_new[None])                      # (Tc, Bp, 1)
    l_scr[...] = corr * l_scr[...] + jnp.sum(w_exp, axis=0)
    acc_scr[...] = corr * acc_scr[...] + jnp.sum(w_exp * proj, axis=0)
    m_scr[...] = m_new

    # ---- sequential LSTM recurrence: only h @ whh stays in the loop ----
    def lstm_step(t, carry):
        h, c = carry
        row0 = pl.multiple_of(t * Bp, Bp)
        gates = (gx_scr[pl.ds(row0, Bp), :]
                 + jnp.dot(h, whh_ref[...], preferred_element_type=jnp.float32))
        i_g = jax.nn.sigmoid(gates[:, 0 * Hg:1 * Hg])
        f_g = jax.nn.sigmoid(gates[:, 1 * Hg:2 * Hg])
        g_g = jnp.tanh(gates[:, 2 * Hg:3 * Hg])
        o_g = jax.nn.sigmoid(gates[:, 3 * Hg:4 * Hg])
        c_new = f_g * c + i_g * g_g
        h_new = o_g * jnp.tanh(c_new)
        if needs_mask:
            valid = (step * Tc + t) < t_real
            h_new = jnp.where(valid, h_new, h)
            c_new = jnp.where(valid, c_new, c)
        return h_new, c_new

    unroll = True if Tc <= 16 else 8     # partial unroll once chunks get large
    h_fin, c_fin = lax.fori_loop(0, Tc, lstm_step,
                                 (h_scr[...], c_scr[...]), unroll=unroll)
    h_scr[...] = h_fin
    c_scr[...] = c_fin

    # ---- finalize: memory = softmax-weighted sum, then decoder ----
    @pl.when(step == n_steps - 1)
    def _finalize():
        memory = acc_scr[...] / l_scr[...]
        out_ref[...] = (
            jnp.sum(h_scr[...] * dwh_ref[...], axis=-1, keepdims=True)
            + jnp.sum(memory * dwm_ref[...], axis=-1, keepdims=True)
            + db_ref[...])


def anomaly_aware_lstm(x, kp, *, time_chunk=None, chunk_vmem_budget=8 << 20):
    """x: (B, T, D) float32  ->  (B, 1) float32"""
    B, T, D = x.shape
    Bp = max(8, -(-B // 8) * 8)                  # pad batch to a full sublane tile

    Hg = kp["whh"].shape[0]
    G = kp["whh"].shape[1]
    NG = kp["wfused"].shape[1]
    AH = kp["aw2"].shape[1]
    AP = kp["dwm"].shape[1]

    # Chunk sizing: one chunk for small problems; otherwise bound
    #   gx_scr (Tc*Bp*G*4) + double-buffered x block (2*Tc*Bp*D*4)
    # by the per-chunk VMEM budget (keeps v7x's 64 MiB comfortable).
    if time_chunk is None:
        per_t = Bp * 4 * (G + 2 * D)
        time_chunk = max(1, min(T, chunk_vmem_budget // per_t))
    tc = max(1, min(time_chunk, T))
    n_chunks = -(-T // tc)
    t_pad = n_chunks * tc
    rows = tc * Bp

    # pad batch & time, go time-major, flatten to (Tpad*Bp, D)
    x_pad = jnp.zeros((Bp, t_pad, D), x.dtype).at[:B, :T].set(x)
    x_flat = jnp.transpose(x_pad, (1, 0, 2)).reshape(t_pad * Bp, D)

    const = lambda t: (0, 0)

    out = pl.pallas_call(
        functools.partial(_anomaly_lstm_kernel, t_real=T),
        out_shape=jax.ShapeDtypeStruct((Bp, 1), jnp.float32),
        grid=(n_chunks,),
        in_specs=[
            pl.BlockSpec((rows, D), lambda t: (t, 0)),     # x: time-chunked stream
            pl.BlockSpec((D, NG), const),                  # fused weights
            pl.BlockSpec((1, NG), const),                  # fused biases
            pl.BlockSpec((Hg, G), const),                  # whh
            pl.BlockSpec((1, AH), const),                  # aw2
            pl.BlockSpec((1, 1), const),                   # ab2
            pl.BlockSpec((1, Hg), const),                  # dwh
            pl.BlockSpec((1, AP), const),                  # dwm
            pl.BlockSpec((1, 1), const),                   # db
        ],
        out_specs=pl.BlockSpec((Bp, 1), lambda t: (0, 0)),
        scratch_shapes=[
            pltpu.VMEM((rows, G), jnp.float32),            # gate pre-activations
            pltpu.VMEM((Bp, Hg), jnp.float32),             # h carry
            pltpu.VMEM((Bp, Hg), jnp.float32),             # c carry
            pltpu.VMEM((Bp, 1), jnp.float32),              # softmax running max
            pltpu.VMEM((Bp, 1), jnp.float32),              # softmax running denom
            pltpu.VMEM((Bp, AP), jnp.float32),             # weighted-memory accumulator
        ],
        compiler_params=pltpu.CompilerParams(
            dimension_semantics=("arbitrary",),
            vmem_limit_bytes=32 * 1024 * 1024,
        ),
    )(x_flat, kp["wfused"], kp["bfused"], kp["whh"], kp["aw2"], kp["ab2"],
      kp["dwh"], kp["dwm"], kp["db"])
    return out[:B]


def init_params(key, input_dim=64, hidden_dim=64, anomaly_dim=32):
    """Raw parameters in PyTorch layout / init ranges."""
    D, H, A = input_dim, hidden_dim, anomaly_dim
    ks = jax.random.split(key, 12)
    u = lambda k, shape, bound: jax.random.uniform(k, shape, jnp.float32, -bound, bound)
    kl = 1.0 / (H ** 0.5)
    ka = 1.0 / (D ** 0.5)
    kb = 1.0 / (64 ** 0.5)
    kd = 1.0 / ((H + A) ** 0.5)
    return dict(
        w_ih=u(ks[0], (4 * H, D), kl),   # gate order i, f, g, o
        w_hh=u(ks[1], (4 * H, H), kl),
        b_ih=u(ks[2], (4 * H,), kl),
        b_hh=u(ks[3], (4 * H,), kl),
        aw1=u(ks[4], (64, D), ka),
        ab1=u(ks[5], (64,), ka),
        aw2=u(ks[6], (1, 64), kb),
        ab2=u(ks[7], (1,), kb),
        mw=u(ks[8], (A, D), ka),
        mb=u(ks[9], (A,), ka),
        dw=u(ks[10], (1, H + A), kd),
        db=u(ks[11], (1,), kd),
    )


def prepare_kernel_params(p):
    """Transpose, pad to 64-lane gate slabs, fuse all x-side weights column-wise.

    Layout (columns of the fused weight):
      [ i | f | g | o ]  each Hg lanes  (G = 4*Hg total)
      [ anomaly-hidden ] AH lanes
      [ mem-proj       ] AP lanes
    """
    D = p["w_ih"].shape[1]
    H = p["w_hh"].shape[1]
    A = p["mw"].shape[0]
    E = p["aw1"].shape[0]
    Hg = -(-H // 64) * 64           # per-gate lane width (pairs of gates share a 128-lane tile)
    AH = -(-E // 64) * 64
    AP = -(-A // 64) * 64
    G = 4 * Hg

    wih = jnp.zeros((D, G), jnp.float32)
    whh = jnp.zeros((Hg, G), jnp.float32)
    b_g = jnp.zeros((1, G), jnp.float32)
    b_sum = p["b_ih"] + p["b_hh"]
    for g in range(4):
        wih = wih.at[:, g * Hg:g * Hg + H].set(p["w_ih"][g * H:(g + 1) * H, :].T)
        whh = whh.at[:H, g * Hg:g * Hg + H].set(p["w_hh"][g * H:(g + 1) * H, :].T)
        b_g = b_g.at[0, g * Hg:g * Hg + H].set(b_sum[g * H:(g + 1) * H])

    aw1 = jnp.zeros((D, AH), jnp.float32).at[:, :E].set(p["aw1"].T)
    ab1 = jnp.zeros((1, AH), jnp.float32).at[0, :E].set(p["ab1"])
    aw2 = jnp.zeros((1, AH), jnp.float32).at[0, :E].set(p["aw2"][0])
    ab2 = p["ab2"].reshape(1, 1)

    mw = jnp.zeros((D, AP), jnp.float32).at[:, :A].set(p["mw"].T)
    mb = jnp.zeros((1, AP), jnp.float32).at[0, :A].set(p["mb"])

    dwh = jnp.zeros((1, Hg), jnp.float32).at[0, :H].set(p["dw"][0, :H])
    dwm = jnp.zeros((1, AP), jnp.float32).at[0, :A].set(p["dw"][0, H:])
    db = p["db"].reshape(1, 1)

    # Invariant (load-bearing): padded rows/cols of whh and padded bias lanes
    # are exactly zero so padded h/c lanes stay zero through the recurrence.
    if Hg > H:
        assert bool(jnp.all(whh[H:, :] == 0.0))
        assert all(bool(jnp.all(b_g[0, g * Hg + H:(g + 1) * Hg] == 0.0)) for g in range(4))

    return dict(
        wfused=jnp.concatenate([wih, aw1, mw], axis=1),   # (D, G + AH + AP)
        bfused=jnp.concatenate([b_g, ab1, mb], axis=1),   # (1, G + AH + AP)
        whh=whh, aw2=aw2, ab2=ab2, dwh=dwh, dwm=dwm, db=db,
    )


def reference(x, p):
    """Pure-JAX reference mirroring the PyTorch forward semantics."""
    B, T, D = x.shape
    H = p["w_hh"].shape[1]
    hp = lax.Precision.HIGHEST
    b = p["b_ih"] + p["b_hh"]

    def cell(carry, xt):
        h, c = carry
        gates = (jnp.dot(xt, p["w_ih"].T, precision=hp)
                 + jnp.dot(h, p["w_hh"].T, precision=hp) + b)
        i = jax.nn.sigmoid(gates[:, :H])
        f = jax.nn.sigmoid(gates[:, H:2 * H])
        g = jnp.tanh(gates[:, 2 * H:3 * H])
        o = jax.nn.sigmoid(gates[:, 3 * H:])
        c = f * c + i * g
        h = o * jnp.tanh(c)
        return (h, c), None

    x_tm = jnp.transpose(x, (1, 0, 2))
    (h_last, _), _ = lax.scan(
        cell, (jnp.zeros((B, H), jnp.float32), jnp.zeros((B, H), jnp.float32)), x_tm)

    h1 = jnp.maximum(jnp.einsum("btd,ed->bte", x, p["aw1"], precision=hp) + p["ab1"], 0.0)
    scores = jax.nn.sigmoid(
        jnp.einsum("bte,e->bt", h1, p["aw2"][0], precision=hp) + p["ab2"][0])
    w = jax.nn.softmax(scores, axis=1)[..., None]
    proj = jnp.einsum("btd,ad->bta", x, p["mw"], precision=hp) + p["mb"]
    memory = jnp.sum(w * proj, axis=1)
    feat = jnp.concatenate([h_last, memory], axis=-1)
    return jnp.dot(feat, p["dw"].T, precision=hp) + p["db"]


if __name__ == "__main__":
    B, T, D, H, A = 2, 8, 64, 64, 32
    key = jax.random.PRNGKey(0)
    kx, kp = jax.random.split(key)
    x = jax.random.normal(kx, (B, T, D), jnp.float32)
    raw = init_params(kp, input_dim=D, hidden_dim=H, anomaly_dim=A)
    kparams = prepare_kernel_params(raw)

    out = jax.block_until_ready(anomaly_aware_lstm(x, kparams))
    ref = jax.block_until_ready(reference(x, raw))

    assert out.shape == (B, 1), out.shape
    assert jnp.allclose(out, ref, rtol=5e-3, atol=5e-3), (out, ref)
    print("KERNEL_OK")
</pallas_src>

<mosaic_0001>
module attributes {stable_mosaic.version = 11 : i64} {
  func.func @_anomaly_lstm_kernel(%arg0: i32, %arg1: memref<64x64xf32, #tpu.memory_space<vmem>>, %arg2: memref<64x384xf32, #tpu.memory_space<vmem>>, %arg3: memref<1x384xf32, #tpu.memory_space<vmem>>, %arg4: memref<64x256xf32, #tpu.memory_space<vmem>>, %arg5: memref<1x64xf32, #tpu.memory_space<vmem>>, %arg6: memref<1x1xf32, #tpu.memory_space<vmem>>, %arg7: memref<1x64xf32, #tpu.memory_space<vmem>>, %arg8: memref<1x64xf32, #tpu.memory_space<vmem>>, %arg9: memref<1x1xf32, #tpu.memory_space<vmem>>, %arg10: memref<8x1xf32, #tpu.memory_space<vmem>>, %arg11: memref<64x256xf32, #tpu.memory_space<vmem>>, %arg12: memref<8x64xf32, #tpu.memory_space<vmem>>, %arg13: memref<8x64xf32, #tpu.memory_space<vmem>>, %arg14: memref<8x1xf32, #tpu.memory_space<vmem>>, %arg15: memref<8x1xf32, #tpu.memory_space<vmem>>, %arg16: memref<8x64xf32, #tpu.memory_space<vmem>>) attributes {dimension_semantics = [#tpu.dimension_semantics<arbitrary>], iteration_bounds = array<i64: 1>, scalar_prefetch = 0 : i64, scratch_operands = 6 : i64, tpu.core_type = #tpu.core_type<tc>, window_params = [{transform_indices = @transform_0, window_bounds = array<i64: 64, 64>}, {pipeline_mode = #tpu.pipeline_mode<synchronous>, transform_indices = @transform_1, window_bounds = array<i64: 64, 384>}, {pipeline_mode = #tpu.pipeline_mode<synchronous>, transform_indices = @transform_2, window_bounds = array<i64: 1, 384>}, {pipeline_mode = #tpu.pipeline_mode<synchronous>, transform_indices = @transform_3, window_bounds = array<i64: 64, 256>}, {pipeline_mode = #tpu.pipeline_mode<synchronous>, transform_indices = @transform_4, window_bounds = array<i64: 1, 64>}, {pipeline_mode = #tpu.pipeline_mode<synchronous>, transform_indices = @transform_5, window_bounds = array<i64: 1, 1>}, {pipeline_mode = #tpu.pipeline_mode<synchronous>, transform_indices = @transform_6, window_bounds = array<i64: 1, 64>}, {pipeline_mode = #tpu.pipeline_mode<synchronous>, transform_indices = @transform_7, window_bounds = array<i64: 1, 64>}, {pipeline_mode = #tpu.pipeline_mode<synchronous>, transform_indices = @transform_8, window_bounds = array<i64: 1, 1>}, {pipeline_mode = #tpu.pipeline_mode<synchronous>, transform_indices = @transform_9, window_bounds = array<i64: 8, 1>}]} {
    %c0_i32 = arith.constant 0 : i32
    %0 = arith.cmpi eq, %arg0, %c0_i32 : i32
    %1 = arith.extui %0 : i1 to i32
    %c0_i32_0 = arith.constant 0 : i32
    %2 = arith.cmpi ne, %1, %c0_i32_0 : i32
    scf.if %2 {
      %cst_105 = arith.constant 0.000000e+00 : f32
      %318 = vector.broadcast %cst_105 : f32 to vector<8x64xf32>
      %c0_106 = arith.constant 0 : index
      %c0_107 = arith.constant 0 : index
      %319 = vector.load %arg12[%c0_106, %c0_107] : memref<8x64xf32, #tpu.memory_space<vmem>>, vector<8x64xf32>
      tpu.vector_store %arg12[%c0_106, %c0_107], %318 {strides = array<i32>} : memref<8x64xf32, #tpu.memory_space<vmem>>, vector<8x64xf32>,
      %cst_108 = arith.constant 0.000000e+00 : f32
      %320 = vector.broadcast %cst_108 : f32 to vector<8x64xf32>
      %c0_109 = arith.constant 0 : index
      %c0_110 = arith.constant 0 : index
      %321 = vector.load %arg13[%c0_109, %c0_110] : memref<8x64xf32, #tpu.memory_space<vmem>>, vector<8x64xf32>
      tpu.vector_store %arg13[%c0_109, %c0_110], %320 {strides = array<i32>} : memref<8x64xf32, #tpu.memory_space<vmem>>, vector<8x64xf32>,
      %cst_111 = arith.constant 0xFF800000 : f32
      %322 = vector.broadcast %cst_111 : f32 to vector<8x1xf32>
      %c0_112 = arith.constant 0 : index
      %c0_113 = arith.constant 0 : index
      %323 = vector.load %arg14[%c0_112, %c0_113] : memref<8x1xf32, #tpu.memory_space<vmem>>, vector<8x1xf32>
      tpu.vector_store %arg14[%c0_112, %c0_113], %322 {strides = array<i32>} : memref<8x1xf32, #tpu.memory_space<vmem>>, vector<8x1xf32>,
      %cst_114 = arith.constant 0.000000e+00 : f32
      %324 = vector.broadcast %cst_114 : f32 to vector<8x1xf32>
      %c0_115 = arith.constant 0 : index
      %c0_116 = arith.constant 0 : index
      %325 = vector.load %arg15[%c0_115, %c0_116] : memref<8x1xf32, #tpu.memory_space<vmem>>, vector<8x1xf32>
      tpu.vector_store %arg15[%c0_115, %c0_116], %324 {strides = array<i32>} : memref<8x1xf32, #tpu.memory_space<vmem>>, vector<8x1xf32>,
      %cst_117 = arith.constant 0.000000e+00 : f32
      %326 = vector.broadcast %cst_117 : f32 to vector<8x64xf32>
      %c0_118 = arith.constant 0 : index
      %c0_119 = arith.constant 0 : index
      %327 = vector.load %arg16[%c0_118, %c0_119] : memref<8x64xf32, #tpu.memory_space<vmem>>, vector<8x64xf32>
      tpu.vector_store %arg16[%c0_118, %c0_119], %326 {strides = array<i32>} : memref<8x64xf32, #tpu.memory_space<vmem>>, vector<8x64xf32>,
    } else {
    }
    %c0 = arith.constant 0 : index
    %c0_1 = arith.constant 0 : index
    %3 = vector.load %arg1[%c0, %c0_1] : memref<64x64xf32, #tpu.memory_space<vmem>>, vector<64x64xf32>
    %c0_2 = arith.constant 0 : index
    %c0_3 = arith.constant 0 : index
    %4 = vector.load %arg2[%c0_2, %c0_3] : memref<64x384xf32, #tpu.memory_space<vmem>>, vector<64x384xf32>
    %cst = arith.constant dense<0.000000e+00> : vector<64x384xf32>
    %5 = tpu.matmul %3, %4, %cst {dimension_numbers = #tpu.dot_dimension_numbers<[1], [0], [0], [1], [0, 0, 1, 1], [], []>} : vector<64x64xf32>, vector<64x384xf32>, vector<64x384xf32> -> vector<64x384xf32>
    %c0_4 = arith.constant 0 : index
    %c0_5 = arith.constant 0 : index
    %6 = vector.load %arg3[%c0_4, %c0_5] : memref<1x384xf32, #tpu.memory_space<vmem>>, vector<1x384xf32>
    %7 = vector.broadcast %6 : vector<1x384xf32> to vector<64x384xf32>
    %8 = arith.addf %5, %7 : vector<64x384xf32>
    %9 = vector.extract_strided_slice %8 {offsets = [0, 0], sizes = [64, 256], strides = [1, 1]} : vector<64x384xf32> to vector<64x256xf32>
    %c0_6 = arith.constant 0 : index
    %c0_7 = arith.constant 0 : index
    %10 = vector.load %arg11[%c0_6, %c0_7] : memref<64x256xf32, #tpu.memory_space<vmem>>, vector<64x256xf32>
    tpu.vector_store %arg11[%c0_6, %c0_7], %9 {strides = array<i32>} : memref<64x256xf32, #tpu.memory_space<vmem>>, vector<64x256xf32>,
    %11 = vector.extract_strided_slice %8 {offsets = [0, 256], sizes = [64, 64], strides = [1, 1]} : vector<64x384xf32> to vector<64x64xf32>
    %cst_8 = arith.constant 0.000000e+00 : f32
    %12 = vector.broadcast %cst_8 : f32 to vector<64x64xf32>
    %13 = arith.maximumf %11, %12 : vector<64x64xf32>
    %14 = vector.shape_cast %13 : vector<64x64xf32> to vector<8x8x64xf32>
    %15 = vector.extract_strided_slice %8 {offsets = [0, 320], sizes = [64, 64], strides = [1, 1]} : vector<64x384xf32> to vector<64x64xf32>
    %16 = vector.shape_cast %15 : vector<64x64xf32> to vector<8x8x64xf32>
    %c0_9 = arith.constant 0 : index
    %c0_10 = arith.constant 0 : index
    %17 = vector.load %arg5[%c0_9, %c0_10] : memref<1x64xf32, #tpu.memory_space<vmem>>, vector<1x64xf32>
    %18 = vector.shape_cast %17 : vector<1x64xf32> to vector<1x1x64xf32>
    %19 = vector.broadcast %18 : vector<1x1x64xf32> to vector<8x8x64xf32>
    %20 = arith.mulf %14, %19 : vector<8x8x64xf32>
    %cst_11 = arith.constant dense<0.000000e+00> : vector<8x8xf32>
    %21 = vector.multi_reduction <add>, %20, %cst_11 [2] : vector<8x8x64xf32> to vector<8x8xf32>
    %22 = vector.shape_cast %21 : vector<8x8xf32> to vector<8x8x1xf32>
    %c0_12 = arith.constant 0 : index
    %c0_13 = arith.constant 0 : index
    %23 = vector.load %arg6[%c0_12, %c0_13] : memref<1x1xf32, #tpu.memory_space<vmem>>, vector<1x1xf32>
    %24 = vector.shape_cast %23 : vector<1x1xf32> to vector<1x1x1xf32>
    %25 = vector.broadcast %24 : vector<1x1x1xf32> to vector<8x8x1xf32>
    %26 = arith.addf %22, %25 : vector<8x8x1xf32>
    %27 = arith.negf %26 : vector<8x8x1xf32>
    %28 = math.exp %27 : vector<8x8x1xf32>
    %cst_14 = arith.constant 1.000000e+00 : f32
    %29 = vector.broadcast %cst_14 : f32 to vector<8x8x1xf32>
    %30 = arith.addf %29, %28 : vector<8x8x1xf32>
    %31 = arith.divf %29, %30 : vector<8x8x1xf32>
    %c0_15 = arith.constant 0 : index
    %c0_16 = arith.constant 0 : index
    %32 = vector.load %arg14[%c0_15, %c0_16] : memref<8x1xf32, #tpu.memory_space<vmem>>, vector<8x1xf32>
    %cst_17 = arith.constant dense<0xFF800000> : vector<8x1xf32>
    %33 = vector.multi_reduction <maximumf>, %31, %cst_17 [0] : vector<8x8x1xf32> to vector<8x1xf32>
    %34 = arith.maximumf %32, %33 : vector<8x1xf32>
    %35 = arith.subf %32, %34 : vector<8x1xf32>
    %36 = math.exp %35 : vector<8x1xf32>
    %37 = vector.shape_cast %34 : vector<8x1xf32> to vector<1x8x1xf32>
    %38 = vector.broadcast %37 : vector<1x8x1xf32> to vector<8x8x1xf32>
    %39 = arith.subf %31, %38 : vector<8x8x1xf32>
    %40 = math.exp %39 : vector<8x8x1xf32>
    %c0_18 = arith.constant 0 : index
    %c0_19 = arith.constant 0 : index
    %41 = vector.load %arg15[%c0_18, %c0_19] : memref<8x1xf32, #tpu.memory_space<vmem>>, vector<8x1xf32>
    %42 = arith.mulf %36, %41 : vector<8x1xf32>
    %cst_20 = arith.constant dense<0.000000e+00> : vector<8x1xf32>
    %43 = vector.multi_reduction <add>, %40, %cst_20 [0] : vector<8x8x1xf32> to vector<8x1xf32>
    %44 = arith.addf %42, %43 : vector<8x1xf32>
    %c0_21 = arith.constant 0 : index
    %c0_22 = arith.constant 0 : index
    %45 = vector.load %arg15[%c0_21, %c0_22] : memref<8x1xf32, #tpu.memory_space<vmem>>, vector<8x1xf32>
    tpu.vector_store %arg15[%c0_21, %c0_22], %44 {strides = array<i32>} : memref<8x1xf32, #tpu.memory_space<vmem>>, vector<8x1xf32>,
    %c0_23 = arith.constant 0 : index
    %c0_24 = arith.constant 0 : index
    %46 = vector.load %arg16[%c0_23, %c0_24] : memref<8x64xf32, #tpu.memory_space<vmem>>, vector<8x64xf32>
    %47 = vector.broadcast %36 : vector<8x1xf32> to vector<8x64xf32>
    %48 = arith.mulf %47, %46 : vector<8x64xf32>
    %49 = vector.broadcast %40 : vector<8x8x1xf32> to vector<8x8x64xf32>
    %50 = arith.mulf %49, %16 : vector<8x8x64xf32>
    %cst_25 = arith.constant dense<0.000000e+00> : vector<8x64xf32>
    %51 = vector.multi_reduction <add>, %50, %cst_25 [0] : vector<8x8x64xf32> to vector<8x64xf32>
    %52 = arith.addf %48, %51 : vector<8x64xf32>
    %c0_26 = arith.constant 0 : index
    %c0_27 = arith.constant 0 : index
    %53 = vector.load %arg16[%c0_26, %c0_27] : memref<8x64xf32, #tpu.memory_space<vmem>>, vector<8x64xf32>
    tpu.vector_store %arg16[%c0_26, %c0_27], %52 {strides = array<i32>} : memref<8x64xf32, #tpu.memory_space<vmem>>, vector<8x64xf32>,
    %c0_28 = arith.constant 0 : index
    %c0_29 = arith.constant 0 : index
    %54 = vector.load %arg14[%c0_28, %c0_29] : memref<8x1xf32, #tpu.memory_space<vmem>>, vector<8x1xf32>
    tpu.vector_store %arg14[%c0_28, %c0_29], %34 {strides = array<i32>} : memref<8x1xf32, #tpu.memory_space<vmem>>, vector<8x1xf32>,
    %c0_30 = arith.constant 0 : index
    %c0_31 = arith.constant 0 : index
    %55 = vector.load %arg12[%c0_30, %c0_31] : memref<8x64xf32, #tpu.memory_space<vmem>>, vector<8x64xf32>
    %c0_32 = arith.constant 0 : index
    %c0_33 = arith.constant 0 : index
    %56 = vector.load %arg13[%c0_32, %c0_33] : memref<8x64xf32, #tpu.memory_space<vmem>>, vector<8x64xf32>
    %c0_i32_34 = arith.constant 0 : i32
    %c8_i32 = arith.constant 8 : i32
    %57 = arith.muli %c0_i32_34, %c8_i32 : i32
    %58 = tpu.assume_multiple %57, 8 : i32
    %59 = arith.index_cast %58 : i32 to index
    %c0_35 = arith.constant 0 : index
    %60 = vector.load %arg11[%59, %c0_35] : memref<64x256xf32, #tpu.memory_space<vmem>>, vector<8x256xf32>
    %c0_36 = arith.constant 0 : index
    %c0_37 = arith.constant 0 : index
    %61 = vector.load %arg4[%c0_36, %c0_37] : memref<64x256xf32, #tpu.memory_space<vmem>>, vector<64x256xf32>
    %cst_38 = arith.constant dense<0.000000e+00> : vector<8x256xf32>
    %62 = tpu.matmul %55, %61, %cst_38 {dimension_numbers = #tpu.dot_dimension_numbers<[1], [0], [0], [1], [0, 0, 1, 1], [], []>} : vector<8x64xf32>, vector<64x256xf32>, vector<8x256xf32> -> vector<8x256xf32>
    %63 = arith.addf %60, %62 : vector<8x256xf32>
    %64 = vector.extract_strided_slice %63 {offsets = [0, 0], sizes = [8, 64], strides = [1, 1]} : vector<8x256xf32> to vector<8x64xf32>
    %65 = arith.negf %64 : vector<8x64xf32>
    %66 = math.exp %65 : vector<8x64xf32>
    %cst_39 = arith.constant 1.000000e+00 : f32
    %67 = vector.broadcast %cst_39 : f32 to vector<8x64xf32>
    %68 = arith.addf %67, %66 : vector<8x64xf32>
    %69 = arith.divf %67, %68 : vector<8x64xf32>
    %70 = vector.extract_strided_slice %63 {offsets = [0, 64], sizes = [8, 64], strides = [1, 1]} : vector<8x256xf32> to vector<8x64xf32>
    %71 = arith.negf %70 : vector<8x64xf32>
    %72 = math.exp %71 : vector<8x64xf32>
    %cst_40 = arith.constant 1.000000e+00 : f32
    %73 = vector.broadcast %cst_40 : f32 to vector<8x64xf32>
    %74 = arith.addf %73, %72 : vector<8x64xf32>
    %75 = arith.divf %73, %74 : vector<8x64xf32>
    %76 = vector.extract_strided_slice %63 {offsets = [0, 128], sizes = [8, 64], strides = [1, 1]} : vector<8x256xf32> to vector<8x64xf32>
    %77 = math.tanh %76 : vector<8x64xf32>
    %78 = vector.extract_strided_slice %63 {offsets = [0, 192], sizes = [8, 64], strides = [1, 1]} : vector<8x256xf32> to vector<8x64xf32>
    %79 = arith.negf %78 : vector<8x64xf32>
    %80 = math.exp %79 : vector<8x64xf32>
    %cst_41 = arith.constant 1.000000e+00 : f32
    %81 = vector.broadcast %cst_41 : f32 to vector<8x64xf32>
    %82 = arith.addf %81, %80 : vector<8x64xf32>
    %83 = arith.divf %81, %82 : vector<8x64xf32>
    %84 = arith.mulf %75, %56 : vector<8x64xf32>
    %85 = arith.mulf %69, %77 : vector<8x64xf32>
    %86 = arith.addf %84, %85 : vector<8x64xf32>
    %87 = math.tanh %86 : vector<8x64xf32>
    %88 = arith.mulf %83, %87 : vector<8x64xf32>
    %c1_i32 = arith.constant 1 : i32
    %c8_i32_42 = arith.constant 8 : i32
    %89 = arith.muli %c1_i32, %c8_i32_42 : i32
    %90 = tpu.assume_multiple %89, 8 : i32
    %91 = arith.index_cast %90 : i32 to index
    %c0_43 = arith.constant 0 : index
    %92 = vector.load %arg11[%91, %c0_43] : memref<64x256xf32, #tpu.memory_space<vmem>>, vector<8x256xf32>
    %c0_44 = arith.constant 0 : index
    %c0_45 = arith.constant 0 : index
    %93 = vector.load %arg4[%c0_44, %c0_45] : memref<64x256xf32, #tpu.memory_space<vmem>>, vector<64x256xf32>
    %cst_46 = arith.constant dense<0.000000e+00> : vector<8x256xf32>
    %94 = tpu.matmul %88, %93, %cst_46 {dimension_numbers = #tpu.dot_dimension_numbers<[1], [0], [0], [1], [0, 0, 1, 1], [], []>} : vector<8x64xf32>, vector<64x256xf32>, vector<8x256xf32> -> vector<8x256xf32>
    %95 = arith.addf %92, %94 : vector<8x256xf32>
    %96 = vector.extract_strided_slice %95 {offsets = [0, 0], sizes = [8, 64], strides = [1, 1]} : vector<8x256xf32> to vector<8x64xf32>
    %97 = arith.negf %96 : vector<8x64xf32>
    %98 = math.exp %97 : vector<8x64xf32>
    %cst_47 = arith.constant 1.000000e+00 : f32
    %99 = vector.broadcast %cst_47 : f32 to vector<8x64xf32>
    %100 = arith.addf %99, %98 : vector<8x64xf32>
    %101 = arith.divf %99, %100 : vector<8x64xf32>
    %102 = vector.extract_strided_slice %95 {offsets = [0, 64], sizes = [8, 64], strides = [1, 1]} : vector<8x256xf32> to vector<8x64xf32>
    %103 = arith.negf %102 : vector<8x64xf32>
    %104 = math.exp %103 : vector<8x64xf32>
    %cst_48 = arith.constant 1.000000e+00 : f32
    %105 = vector.broadcast %cst_48 : f32 to vector<8x64xf32>
    %106 = arith.addf %105, %104 : vector<8x64xf32>
    %107 = arith.divf %105, %106 : vector<8x64xf32>
    %108 = vector.extract_strided_slice %95 {offsets = [0, 128], sizes = [8, 64], strides = [1, 1]} : vector<8x256xf32> to vector<8x64xf32>
    %109 = math.tanh %108 : vector<8x64xf32>
    %110 = vector.extract_strided_slice %95 {offsets = [0, 192], sizes = [8, 64], strides = [1, 1]} : vector<8x256xf32> to vector<8x64xf32>
    %111 = arith.negf %110 : vector<8x64xf32>
    %112 = math.exp %111 : vector<8x64xf32>
    %cst_49 = arith.constant 1.000000e+00 : f32
    %113 = vector.broadcast %cst_49 : f32 to vector<8x64xf32>
    %114 = arith.addf %113, %112 : vector<8x64xf32>
    %115 = arith.divf %113, %114 : vector<8x64xf32>
    %116 = arith.mulf %107, %86 : vector<8x64xf32>
    %117 = arith.mulf %101, %109 : vector<8x64xf32>
    %118 = arith.addf %116, %117 : vector<8x64xf32>
    %119 = math.tanh %118 : vector<8x64xf32>
    %120 = arith.mulf %115, %119 : vector<8x64xf32>
    %c2_i32 = arith.constant 2 : i32
    %c8_i32_50 = arith.constant 8 : i32
    %121 = arith.muli %c2_i32, %c8_i32_50 : i32
    %122 = tpu.assume_multiple %121, 8 : i32
    %123 = arith.index_cast %122 : i32 to index
    %c0_51 = arith.constant 0 : index
    %124 = vector.load %arg11[%123, %c0_51] : memref<64x256xf32, #tpu.memory_space<vmem>>, vector<8x256xf32>
    %c0_52 = arith.constant 0 : index
    %c0_53 = arith.constant 0 : index
    %125 = vector.load %arg4[%c0_52, %c0_53] : memref<64x256xf32, #tpu.memory_space<vmem>>, vector<64x256xf32>
    %cst_54 = arith.constant dense<0.000000e+00> : vector<8x256xf32>
    %126 = tpu.matmul %120, %125, %cst_54 {dimension_numbers = #tpu.dot_dimension_numbers<[1], [0], [0], [1], [0, 0, 1, 1], [], []>} : vector<8x64xf32>, vector<64x256xf32>, vector<8x256xf32> -> vector<8x256xf32>
    %127 = arith.addf %124, %126 : vector<8x256xf32>
    %128 = vector.extract_strided_slice %127 {offsets = [0, 0], sizes = [8, 64], strides = [1, 1]} : vector<8x256xf32> to vector<8x64xf32>
    %129 = arith.negf %128 : vector<8x64xf32>
    %130 = math.exp %129 : vector<8x64xf32>
    %cst_55 = arith.constant 1.000000e+00 : f32
    %131 = vector.broadcast %cst_55 : f32 to vector<8x64xf32>
    %132 = arith.addf %131, %130 : vector<8x64xf32>
    %133 = arith.divf %131, %132 : vector<8x64xf32>
    %134 = vector.extract_strided_slice %127 {offsets = [0, 64], sizes = [8, 64], strides = [1, 1]} : vector<8x256xf32> to vector<8x64xf32>
    %135 = arith.negf %134 : vector<8x64xf32>
    %136 = math.exp %135 : vector<8x64xf32>
    %cst_56 = arith.constant 1.000000e+00 : f32
    %137 = vector.broadcast %cst_56 : f32 to vector<8x64xf32>
    %138 = arith.addf %137, %136 : vector<8x64xf32>
    %139 = arith.divf %137, %138 : vector<8x64xf32>
    %140 = vector.extract_strided_slice %127 {offsets = [0, 128], sizes = [8, 64], strides = [1, 1]} : vector<8x256xf32> to vector<8x64xf32>
    %141 = math.tanh %140 : vector<8x64xf32>
    %142 = vector.extract_strided_slice %127 {offsets = [0, 192], sizes = [8, 64], strides = [1, 1]} : vector<8x256xf32> to vector<8x64xf32>
    %143 = arith.negf %142 : vector<8x64xf32>
    %144 = math.exp %143 : vector<8x64xf32>
    %cst_57 = arith.constant 1.000000e+00 : f32
    %145 = vector.broadcast %cst_57 : f32 to vector<8x64xf32>
    %146 = arith.addf %145, %144 : vector<8x64xf32>
    %147 = arith.divf %145, %146 : vector<8x64xf32>
    %148 = arith.mulf %139, %118 : vector<8x64xf32>
    %149 = arith.mulf %133, %141 : vector<8x64xf32>
    %150 = arith.addf %148, %149 : vector<8x64xf32>
    %151 = math.tanh %150 : vector<8x64xf32>
    %152 = arith.mulf %147, %151 : vector<8x64xf32>
    %c3_i32 = arith.constant 3 : i32
    %c8_i32_58 = arith.constant 8 : i32
    %153 = arith.muli %c3_i32, %c8_i32_58 : i32
    %154 = tpu.assume_multiple %153, 8 : i32
    %155 = arith.index_cast %154 : i32 to index
    %c0_59 = arith.constant 0 : index
    %156 = vector.load %arg11[%155, %c0_59] : memref<64x256xf32, #tpu.memory_space<vmem>>, vector<8x256xf32>
    %c0_60 = arith.constant 0 : index
    %c0_61 = arith.constant 0 : index
    %157 = vector.load %arg4[%c0_60, %c0_61] : memref<64x256xf32, #tpu.memory_space<vmem>>, vector<64x256xf32>
    %cst_62 = arith.constant dense<0.000000e+00> : vector<8x256xf32>
    %158 = tpu.matmul %152, %157, %cst_62 {dimension_numbers = #tpu.dot_dimension_numbers<[1], [0], [0], [1], [0, 0, 1, 1], [], []>} : vector<8x64xf32>, vector<64x256xf32>, vector<8x256xf32> -> vector<8x256xf32>
    %159 = arith.addf %156, %158 : vector<8x256xf32>
    %160 = vector.extract_strided_slice %159 {offsets = [0, 0], sizes = [8, 64], strides = [1, 1]} : vector<8x256xf32> to vector<8x64xf32>
    %161 = arith.negf %160 : vector<8x64xf32>
    %162 = math.exp %161 : vector<8x64xf32>
    %cst_63 = arith.constant 1.000000e+00 : f32
    %163 = vector.broadcast %cst_63 : f32 to vector<8x64xf32>
    %164 = arith.addf %163, %162 : vector<8x64xf32>
    %165 = arith.divf %163, %164 : vector<8x64xf32>
    %166 = vector.extract_strided_slice %159 {offsets = [0, 64], sizes = [8, 64], strides = [1, 1]} : vector<8x256xf32> to vector<8x64xf32>
    %167 = arith.negf %166 : vector<8x64xf32>
    %168 = math.exp %167 : vector<8x64xf32>
    %cst_64 = arith.constant 1.000000e+00 : f32
    %169 = vector.broadcast %cst_64 : f32 to vector<8x64xf32>
    %170 = arith.addf %169, %168 : vector<8x64xf32>
    %171 = arith.divf %169, %170 : vector<8x64xf32>
    %172 = vector.extract_strided_slice %159 {offsets = [0, 128], sizes = [8, 64], strides = [1, 1]} : vector<8x256xf32> to vector<8x64xf32>
    %173 = math.tanh %172 : vector<8x64xf32>
    %174 = vector.extract_strided_slice %159 {offsets = [0, 192], sizes = [8, 64], strides = [1, 1]} : vector<8x256xf32> to vector<8x64xf32>
    %175 = arith.negf %174 : vector<8x64xf32>
    %176 = math.exp %175 : vector<8x64xf32>
    %cst_65 = arith.constant 1.000000e+00 : f32
    %177 = vector.broadcast %cst_65 : f32 to vector<8x64xf32>
    %178 = arith.addf %177, %176 : vector<8x64xf32>
    %179 = arith.divf %177, %178 : vector<8x64xf32>
    %180 = arith.mulf %171, %150 : vector<8x64xf32>
    %181 = arith.mulf %165, %173 : vector<8x64xf32>
    %182 = arith.addf %180, %181 : vector<8x64xf32>
    %183 = math.tanh %182 : vector<8x64xf32>
    %184 = arith.mulf %179, %183 : vector<8x64xf32>
    %c4_i32 = arith.constant 4 : i32
    %c8_i32_66 = arith.constant 8 : i32
    %185 = arith.muli %c4_i32, %c8_i32_66 : i32
    %186 = tpu.assume_multiple %185, 8 : i32
    %187 = arith.index_cast %186 : i32 to index
    %c0_67 = arith.constant 0 : index
    %188 = vector.load %arg11[%187, %c0_67] : memref<64x256xf32, #tpu.memory_space<vmem>>, vector<8x256xf32>
    %c0_68 = arith.constant 0 : index
    %c0_69 = arith.constant 0 : index
    %189 = vector.load %arg4[%c0_68, %c0_69] : memref<64x256xf32, #tpu.memory_space<vmem>>, vector<64x256xf32>
    %cst_70 = arith.constant dense<0.000000e+00> : vector<8x256xf32>
    %190 = tpu.matmul %184, %189, %cst_70 {dimension_numbers = #tpu.dot_dimension_numbers<[1], [0], [0], [1], [0, 0, 1, 1], [], []>} : vector<8x64xf32>, vector<64x256xf32>, vector<8x256xf32> -> vector<8x256xf32>
    %191 = arith.addf %188, %190 : vector<8x256xf32>
    %192 = vector.extract_strided_slice %191 {offsets = [0, 0], sizes = [8, 64], strides = [1, 1]} : vector<8x256xf32> to vector<8x64xf32>
    %193 = arith.negf %192 : vector<8x64xf32>
    %194 = math.exp %193 : vector<8x64xf32>
    %cst_71 = arith.constant 1.000000e+00 : f32
    %195 = vector.broadcast %cst_71 : f32 to vector<8x64xf32>
    %196 = arith.addf %195, %194 : vector<8x64xf32>
    %197 = arith.divf %195, %196 : vector<8x64xf32>
    %198 = vector.extract_strided_slice %191 {offsets = [0, 64], sizes = [8, 64], strides = [1, 1]} : vector<8x256xf32> to vector<8x64xf32>
    %199 = arith.negf %198 : vector<8x64xf32>
    %200 = math.exp %199 : vector<8x64xf32>
    %cst_72 = arith.constant 1.000000e+00 : f32
    %201 = vector.broadcast %cst_72 : f32 to vector<8x64xf32>
    %202 = arith.addf %201, %200 : vector<8x64xf32>
    %203 = arith.divf %201, %202 : vector<8x64xf32>
    %204 = vector.extract_strided_slice %191 {offsets = [0, 128], sizes = [8, 64], strides = [1, 1]} : vector<8x256xf32> to vector<8x64xf32>
    %205 = math.tanh %204 : vector<8x64xf32>
    %206 = vector.extract_strided_slice %191 {offsets = [0, 192], sizes = [8, 64], strides = [1, 1]} : vector<8x256xf32> to vector<8x64xf32>
    %207 = arith.negf %206 : vector<8x64xf32>
    %208 = math.exp %207 : vector<8x64xf32>
    %cst_73 = arith.constant 1.000000e+00 : f32
    %209 = vector.broadcast %cst_73 : f32 to vector<8x64xf32>
    %210 = arith.addf %209, %208 : vector<8x64xf32>
    %211 = arith.divf %209, %210 : vector<8x64xf32>
    %212 = arith.mulf %203, %182 : vector<8x64xf32>
    %213 = arith.mulf %197, %205 : vector<8x64xf32>
    %214 = arith.addf %212, %213 : vector<8x64xf32>
    %215 = math.tanh %214 : vector<8x64xf32>
    %216 = arith.mulf %211, %215 : vector<8x64xf32>
    %c5_i32 = arith.constant 5 : i32
    %c8_i32_74 = arith.constant 8 : i32
    %217 = arith.muli %c5_i32, %c8_i32_74 : i32
    %218 = tpu.assume_multiple %217, 8 : i32
    %219 = arith.index_cast %218 : i32 to index
    %c0_75 = arith.constant 0 : index
    %220 = vector.load %arg11[%219, %c0_75] : memref<64x256xf32, #tpu.memory_space<vmem>>, vector<8x256xf32>
    %c0_76 = arith.constant 0 : index
    %c0_77 = arith.constant 0 : index
    %221 = vector.load %arg4[%c0_76, %c0_77] : memref<64x256xf32, #tpu.memory_space<vmem>>, vector<64x256xf32>
    %cst_78 = arith.constant dense<0.000000e+00> : vector<8x256xf32>
    %222 = tpu.matmul %216, %221, %cst_78 {dimension_numbers = #tpu.dot_dimension_numbers<[1], [0], [0], [1], [0, 0, 1, 1], [], []>} : vector<8x64xf32>, vector<64x256xf32>, vector<8x256xf32> -> vector<8x256xf32>
    %223 = arith.addf %220, %222 : vector<8x256xf32>
    %224 = vector.extract_strided_slice %223 {offsets = [0, 0], sizes = [8, 64], strides = [1, 1]} : vector<8x256xf32> to vector<8x64xf32>
    %225 = arith.negf %224 : vector<8x64xf32>
    %226 = math.exp %225 : vector<8x64xf32>
    %cst_79 = arith.constant 1.000000e+00 : f32
    %227 = vector.broadcast %cst_79 : f32 to vector<8x64xf32>
    %228 = arith.addf %227, %226 : vector<8x64xf32>
    %229 = arith.divf %227, %228 : vector<8x64xf32>
    %230 = vector.extract_strided_slice %223 {offsets = [0, 64], sizes = [8, 64], strides = [1, 1]} : vector<8x256xf32> to vector<8x64xf32>
    %231 = arith.negf %230 : vector<8x64xf32>
    %232 = math.exp %231 : vector<8x64xf32>
    %cst_80 = arith.constant 1.000000e+00 : f32
    %233 = vector.broadcast %cst_80 : f32 to vector<8x64xf32>
    %234 = arith.addf %233, %232 : vector<8x64xf32>
    %235 = arith.divf %233, %234 : vector<8x64xf32>
    %236 = vector.extract_strided_slice %223 {offsets = [0, 128], sizes = [8, 64], strides = [1, 1]} : vector<8x256xf32> to vector<8x64xf32>
    %237 = math.tanh %236 : vector<8x64xf32>
    %238 = vector.extract_strided_slice %223 {offsets = [0, 192], sizes = [8, 64], strides = [1, 1]} : vector<8x256xf32> to vector<8x64xf32>
    %239 = arith.negf %238 : vector<8x64xf32>
    %240 = math.exp %239 : vector<8x64xf32>
    %cst_81 = arith.constant 1.000000e+00 : f32
    %241 = vector.broadcast %cst_81 : f32 to vector<8x64xf32>
    %242 = arith.addf %241, %240 : vector<8x64xf32>
    %243 = arith.divf %241, %242 : vector<8x64xf32>
    %244 = arith.mulf %235, %214 : vector<8x64xf32>
    %245 = arith.mulf %229, %237 : vector<8x64xf32>
    %246 = arith.addf %244, %245 : vector<8x64xf32>
    %247 = math.tanh %246 : vector<8x64xf32>
    %248 = arith.mulf %243, %247 : vector<8x64xf32>
    %c6_i32 = arith.constant 6 : i32
    %c8_i32_82 = arith.constant 8 : i32
    %249 = arith.muli %c6_i32, %c8_i32_82 : i32
    %250 = tpu.assume_multiple %249, 8 : i32
    %251 = arith.index_cast %250 : i32 to index
    %c0_83 = arith.constant 0 : index
    %252 = vector.load %arg11[%251, %c0_83] : memref<64x256xf32, #tpu.memory_space<vmem>>, vector<8x256xf32>
    %c0_84 = arith.constant 0 : index
    %c0_85 = arith.constant 0 : index
    %253 = vector.load %arg4[%c0_84, %c0_85] : memref<64x256xf32, #tpu.memory_space<vmem>>, vector<64x256xf32>
    %cst_86 = arith.constant dense<0.000000e+00> : vector<8x256xf32>
    %254 = tpu.matmul %248, %253, %cst_86 {dimension_numbers = #tpu.dot_dimension_numbers<[1], [0], [0], [1], [0, 0, 1, 1], [], []>} : vector<8x64xf32>, vector<64x256xf32>, vector<8x256xf32> -> vector<8x256xf32>
    %255 = arith.addf %252, %254 : vector<8x256xf32>
    %256 = vector.extract_strided_slice %255 {offsets = [0, 0], sizes = [8, 64], strides = [1, 1]} : vector<8x256xf32> to vector<8x64xf32>
    %257 = arith.negf %256 : vector<8x64xf32>
    %258 = math.exp %257 : vector<8x64xf32>
    %cst_87 = arith.constant 1.000000e+00 : f32
    %259 = vector.broadcast %cst_87 : f32 to vector<8x64xf32>
    %260 = arith.addf %259, %258 : vector<8x64xf32>
    %261 = arith.divf %259, %260 : vector<8x64xf32>
    %262 = vector.extract_strided_slice %255 {offsets = [0, 64], sizes = [8, 64], strides = [1, 1]} : vector<8x256xf32> to vector<8x64xf32>
    %263 = arith.negf %262 : vector<8x64xf32>
    %264 = math.exp %263 : vector<8x64xf32>
    %cst_88 = arith.constant 1.000000e+00 : f32
    %265 = vector.broadcast %cst_88 : f32 to vector<8x64xf32>
    %266 = arith.addf %265, %264 : vector<8x64xf32>
    %267 = arith.divf %265, %266 : vector<8x64xf32>
    %268 = vector.extract_strided_slice %255 {offsets = [0, 128], sizes = [8, 64], strides = [1, 1]} : vector<8x256xf32> to vector<8x64xf32>
    %269 = math.tanh %268 : vector<8x64xf32>
    %270 = vector.extract_strided_slice %255 {offsets = [0, 192], sizes = [8, 64], strides = [1, 1]} : vector<8x256xf32> to vector<8x64xf32>
    %271 = arith.negf %270 : vector<8x64xf32>
    %272 = math.exp %271 : vector<8x64xf32>
    %cst_89 = arith.constant 1.000000e+00 : f32
    %273 = vector.broadcast %cst_89 : f32 to vector<8x64xf32>
    %274 = arith.addf %273, %272 : vector<8x64xf32>
    %275 = arith.divf %273, %274 : vector<8x64xf32>
    %276 = arith.mulf %267, %246 : vector<8x64xf32>
    %277 = arith.mulf %261, %269 : vector<8x64xf32>
    %278 = arith.addf %276, %277 : vector<8x64xf32>
    %279 = math.tanh %278 : vector<8x64xf32>
    %280 = arith.mulf %275, %279 : vector<8x64xf32>
    %c7_i32 = arith.constant 7 : i32
    %c8_i32_90 = arith.constant 8 : i32
    %281 = arith.muli %c7_i32, %c8_i32_90 : i32
    %282 = tpu.assume_multiple %281, 8 : i32
    %283 = arith.index_cast %282 : i32 to index
    %c0_91 = arith.constant 0 : index
    %284 = vector.load %arg11[%283, %c0_91] : memref<64x256xf32, #tpu.memory_space<vmem>>, vector<8x256xf32>
    %c0_92 = arith.constant 0 : index
    %c0_93 = arith.constant 0 : index
    %285 = vector.load %arg4[%c0_92, %c0_93] : memref<64x256xf32, #tpu.memory_space<vmem>>, vector<64x256xf32>
    %cst_94 = arith.constant dense<0.000000e+00> : vector<8x256xf32>
    %286 = tpu.matmul %280, %285, %cst_94 {dimension_numbers = #tpu.dot_dimension_numbers<[1], [0], [0], [1], [0, 0, 1, 1], [], []>} : vector<8x64xf32>, vector<64x256xf32>, vector<8x256xf32> -> vector<8x256xf32>
    %287 = arith.addf %284, %286 : vector<8x256xf32>
    %288 = vector.extract_strided_slice %287 {offsets = [0, 0], sizes = [8, 64], strides = [1, 1]} : vector<8x256xf32> to vector<8x64xf32>
    %289 = arith.negf %288 : vector<8x64xf32>
    %290 = math.exp %289 : vector<8x64xf32>
    %cst_95 = arith.constant 1.000000e+00 : f32
    %291 = vector.broadcast %cst_95 : f32 to vector<8x64xf32>
    %292 = arith.addf %291, %290 : vector<8x64xf32>
    %293 = arith.divf %291, %292 : vector<8x64xf32>
    %294 = vector.extract_strided_slice %287 {offsets = [0, 64], sizes = [8, 64], strides = [1, 1]} : vector<8x256xf32> to vector<8x64xf32>
    %295 = arith.negf %294 : vector<8x64xf32>
    %296 = math.exp %295 : vector<8x64xf32>
    %cst_96 = arith.constant 1.000000e+00 : f32
    %297 = vector.broadcast %cst_96 : f32 to vector<8x64xf32>
    %298 = arith.addf %297, %296 : vector<8x64xf32>
    %299 = arith.divf %297, %298 : vector<8x64xf32>
    %300 = vector.extract_strided_slice %287 {offsets = [0, 128], sizes = [8, 64], strides = [1, 1]} : vector<8x256xf32> to vector<8x64xf32>
    %301 = math.tanh %300 : vector<8x64xf32>
    %302 = vector.extract_strided_slice %287 {offsets = [0, 192], sizes = [8, 64], strides = [1, 1]} : vector<8x256xf32> to vector<8x64xf32>
    %303 = arith.negf %302 : vector<8x64xf32>
    %304 = math.exp %303 : vector<8x64xf32>
    %cst_97 = arith.constant 1.000000e+00 : f32
    %305 = vector.broadcast %cst_97 : f32 to vector<8x64xf32>
    %306 = arith.addf %305, %304 : vector<8x64xf32>
    %307 = arith.divf %305, %306 : vector<8x64xf32>
    %308 = arith.mulf %299, %278 : vector<8x64xf32>
    %309 = arith.mulf %293, %301 : vector<8x64xf32>
    %310 = arith.addf %308, %309 : vector<8x64xf32>
    %311 = math.tanh %310 : vector<8x64xf32>
    %312 = arith.mulf %307, %311 : vector<8x64xf32>
    %c8_i32_98 = arith.constant 8 : i32
    %c0_99 = arith.constant 0 : index
    %c0_100 = arith.constant 0 : index
    %313 = vector.load %arg12[%c0_99, %c0_100] : memref<8x64xf32, #tpu.memory_space<vmem>>, vector<8x64xf32>
    tpu.vector_store %arg12[%c0_99, %c0_100], %312 {strides = array<i32>} : memref<8x64xf32, #tpu.memory_space<vmem>>, vector<8x64xf32>,
    %c0_101 = arith.constant 0 : index
    %c0_102 = arith.constant 0 : index
    %314 = vector.load %arg13[%c0_101, %c0_102] : memref<8x64xf32, #tpu.memory_space<vmem>>, vector<8x64xf32>
    tpu.vector_store %arg13[%c0_101, %c0_102], %310 {strides = array<i32>} : memref<8x64xf32, #tpu.memory_space<vmem>>, vector<8x64xf32>,
    %c0_i32_103 = arith.constant 0 : i32
    %315 = arith.cmpi eq, %arg0, %c0_i32_103 : i32
    %316 = arith.extui %315 : i1 to i32
    %c0_i32_104 = arith.constant 0 : i32
    %317 = arith.cmpi ne, %316, %c0_i32_104 : i32
    scf.if %317 {
      %c0_105 = arith.constant 0 : index
      %c0_106 = arith.constant 0 : index
      %318 = vector.load %arg16[%c0_105, %c0_106] : memref<8x64xf32, #tpu.memory_space<vmem>>, vector<8x64xf32>
      %c0_107 = arith.constant 0 : index
      %c0_108 = arith.constant 0 : index
      %319 = vector.load %arg15[%c0_107, %c0_108] : memref<8x1xf32, #tpu.memory_space<vmem>>, vector<8x1xf32>
      %320 = vector.broadcast %319 : vector<8x1xf32> to vector<8x64xf32>
      %321 = arith.divf %318, %320 : vector<8x64xf32>
      %c0_109 = arith.constant 0 : index
      %c0_110 = arith.constant 0 : index
      %322 = vector.load %arg12[%c0_109, %c0_110] : memref<8x64xf32, #tpu.memory_space<vmem>>, vector<8x64xf32>
      %c0_111 = arith.constant 0 : index
      %c0_112 = arith.constant 0 : index
      %323 = vector.load %arg7[%c0_111, %c0_112] : memref<1x64xf32, #tpu.memory_space<vmem>>, vector<1x64xf32>
      %324 = vector.broadcast %323 : vector<1x64xf32> to vector<8x64xf32>
      %325 = arith.mulf %322, %324 : vector<8x64xf32>
      %cst_113 = arith.constant dense<0.000000e+00> : vector<8xf32>
      %326 = vector.multi_reduction <add>, %325, %cst_113 [1] : vector<8x64xf32> to vector<8xf32>
      %327 = vector.shape_cast %326 : vector<8xf32> to vector<8x1xf32>
      %c0_114 = arith.constant 0 : index
      %c0_115 = arith.constant 0 : index
      %328 = vector.load %arg8[%c0_114, %c0_115] : memref<1x64xf32, #tpu.memory_space<vmem>>, vector<1x64xf32>
      %329 = vector.broadcast %328 : vector<1x64xf32> to vector<8x64xf32>
      %330 = arith.mulf %321, %329 : vector<8x64xf32>
      %cst_116 = arith.constant dense<0.000000e+00> : vector<8xf32>
      %331 = vector.multi_reduction <add>, %330, %cst_116 [1] : vector<8x64xf32> to vector<8xf32>
      %332 = vector.shape_cast %331 : vector<8xf32> to vector<8x1xf32>
      %333 = arith.addf %327, %332 : vector<8x1xf32>
      %c0_117 = arith.constant 0 : index
      %c0_118 = arith.constant 0 : index
      %334 = vector.load %arg9[%c0_117, %c0_118] : memref<1x1xf32, #tpu.memory_space<vmem>>, vector<1x1xf32>
      %335 = vector.broadcast %334 : vector<1x1xf32> to vector<8x1xf32>
      %336 = arith.addf %333, %335 : vector<8x1xf32>
      %c0_119 = arith.constant 0 : index
      %c0_120 = arith.constant 0 : index
      %337 = vector.load %arg10[%c0_119, %c0_120] : memref<8x1xf32, #tpu.memory_space<vmem>>, vector<8x1xf32>
      tpu.vector_store %arg10[%c0_119, %c0_120], %336 {strides = array<i32>} : memref<8x1xf32, #tpu.memory_space<vmem>>, vector<8x1xf32>,
    } else {
    }
    return
  }
  func.func @transform_0(%arg0: i32) -> (i32, i32) {
    %c0_i32 = arith.constant 0 : i32
    %c0_i32_0 = arith.constant 0 : i32
    return %arg0, %c0_i32 : i32, i32
  }
  func.func @transform_1(%arg0: i32) -> (i32, i32) {
    %c0_i32 = arith.constant 0 : i32
    %c0_i32_0 = arith.constant 0 : i32
    %c0_i32_1 = arith.constant 0 : i32
    return %c0_i32, %c0_i32_0 : i32, i32
  }
  func.func @transform_2(%arg0: i32) -> (i32, i32) {
    %c0_i32 = arith.constant 0 : i32
    %c0_i32_0 = arith.constant 0 : i32
    %c0_i32_1 = arith.constant 0 : i32
    return %c0_i32, %c0_i32_0 : i32, i32
  }
  func.func @transform_3(%arg0: i32) -> (i32, i32) {
    %c0_i32 = arith.constant 0 : i32
    %c0_i32_0 = arith.constant 0 : i32
    %c0_i32_1 = arith.constant 0 : i32
    return %c0_i32, %c0_i32_0 : i32, i32
  }
  func.func @transform_4(%arg0: i32) -> (i32, i32) {
    %c0_i32 = arith.constant 0 : i32
    %c0_i32_0 = arith.constant 0 : i32
    %c0_i32_1 = arith.constant 0 : i32
    return %c0_i32, %c0_i32_0 : i32, i32
  }
  func.func @transform_5(%arg0: i32) -> (i32, i32) {
    %c0_i32 = arith.constant 0 : i32
    %c0_i32_0 = arith.constant 0 : i32
    %c0_i32_1 = arith.constant 0 : i32
    return %c0_i32, %c0_i32_0 : i32, i32
  }
  func.func @transform_6(%arg0: i32) -> (i32, i32) {
    %c0_i32 = arith.constant 0 : i32
    %c0_i32_0 = arith.constant 0 : i32
    %c0_i32_1 = arith.constant 0 : i32
    return %c0_i32, %c0_i32_0 : i32, i32
  }
  func.func @transform_7(%arg0: i32) -> (i32, i32) {
    %c0_i32 = arith.constant 0 : i32
    %c0_i32_0 = arith.constant 0 : i32
    %c0_i32_1 = arith.constant 0 : i32
    return %c0_i32, %c0_i32_0 : i32, i32
  }
  func.func @transform_8(%arg0: i32) -> (i32, i32) {
    %c0_i32 = arith.constant 0 : i32
    %c0_i32_0 = arith.constant 0 : i32
    %c0_i32_1 = arith.constant 0 : i32
    return %c0_i32, %c0_i32_0 : i32, i32
  }
  func.func @transform_9(%arg0: i32) -> (i32, i32) {
    %c0_i32 = arith.constant 0 : i32
    %c0_i32_0 = arith.constant 0 : i32
    %c0_i32_1 = arith.constant 0 : i32
    return %c0_i32, %c0_i32_0 : i32, i32
  }
}

</mosaic_0001>

<llo_original>
// kernel: tpu_custom_call.1
$region0: #{tpu_custom_call.1}
  #allocation0 [shape = 'u32[]', space=smem, size = 0x4, offset = 0x4, fixed_abs, tag = 'smem constant byte address 0x4 - core index']
  #allocation1 [shape = 'u32[72,128]{1,0:T(1,128)}', space=vmem, size = 0x9000, scoped, tag = 'internal scratch']
  #allocation2 [shape = 'f32[64,256]{1,0:T(8,128)}', space=vmem, size = 0x10000, scoped, tag = 'scratch operand']
  #allocation3 [shape = 'f32[8,64]{1,0:T(8,128)}', space=vmem, size = 0x1000, scoped, tag = 'scratch operand']
  #allocation4 [shape = 'f32[8,64]{1,0:T(8,128)}', space=vmem, size = 0x1000, scoped, tag = 'scratch operand']
  #allocation5 [shape = 'f32[8,1]{1,0:T(8,128)}', space=vmem, size = 0x1000, scoped, tag = 'scratch operand']
  #allocation6 [shape = 'f32[8,1]{1,0:T(8,128)}', space=vmem, size = 0x1000, scoped, tag = 'scratch operand']
  #allocation7 [shape = 'f32[8,64]{1,0:T(8,128)}', space=vmem, size = 0x1000, scoped, tag = 'scratch operand']
  #allocation8 [shape = 'f32[1,1]{1,0:T(1,128)S(1)}', space=vmem, size = 0x200, scoped, tag = 'scoped memory for tpu_custom_call.1']
  #allocation9 [shape = 'f32[1,1]{1,0:T(1,128)S(1)}', space=vmem, size = 0x200, scoped, tag = 'scoped memory for tpu_custom_call.1']
  %s0 = inlined_call_operand.hbm [shape: f32[64,64], index: 0, kind: input, shape index: {}]
  %s1 = inlined_call_operand.hbm [shape: f32[64,384], index: 1, kind: input, shape index: {}]
  %s2 = inlined_call_operand.vmem [shape: f32[1,384], index: 2, kind: input, shape index: {}]
  %s3 = inlined_call_operand.hbm [shape: f32[64,256], index: 3, kind: input, shape index: {}]
  %s4 = inlined_call_operand.vmem [shape: f32[1,64], index: 4, kind: input, shape index: {}]
  %s5 = inlined_call_operand.<no memory space> [shape: f32[1,1], index: 5, kind: input, shape index: {}]
  %s6 = inlined_call_operand.vmem [shape: f32[1,64], index: 6, kind: input, shape index: {}]
  %s7 = inlined_call_operand.vmem [shape: f32[1,64], index: 7, kind: input, shape index: {}]
  %s8 = inlined_call_operand.<no memory space> [shape: f32[1,1], index: 8, kind: input, shape index: {}]
  %s9 = inlined_call_operand.vmem [shape: f32[8,1], index: 9, kind: output, shape index: {}]
  %s10 = sld [smem:[#allocation0]]
  $region66: #{tpu_custom_call.1} parent=0
    _
  %s12 = ssub.s32 1, %s10
  %s13 = scalar_select 0, %s12, %s10
  %v14 = vstv %s5
  %15 = vst [vmem:[#allocation8] sm:$0x1] %v14
  %v16 = vstv %s8
  %17 = vst [vmem:[#allocation9] sm:$0x1] %v16
  $region1: #{tpu_custom_call.1} parent=0
    #allocation10 [shape = 'u8[32768]{0}', space=vmem, size = 0x8000, scoped, tag = 'input window, operand 0, single buffered']
    #allocation11 [shape = 's32[1]{0}', space=sflag, size = 0x4, scoped, tag = 'scoped memory for tpu_custom_call.1']
    #allocation12 [shape = 'u8[98304]{0}', space=vmem, size = 0x18000, scoped, tag = 'input window, operand 1, single buffered']
    #allocation13 [shape = 's32[1]{0}', space=sflag, size = 0x4, scoped, tag = 'scoped memory for tpu_custom_call.1']
    #allocation14 [shape = 'u8[65536]{0}', space=vmem, size = 0x10000, scoped, tag = 'input window, operand 3, single buffered']
    %18 = vsyncpa [#allocation11], 0
    %19 = vsyncpa [#allocation13], 0
    // Predicated region
    $region2: #{tpu_custom_call.1} parent=1 // pred_check
      _
    $region3: #{tpu_custom_call.1} parent=1 // pred_check_branch
      %21 = sbr.rel (0) target = $region5
    $region4: #{tpu_custom_call.1} parent=1 // pred_region
      %23 = vsyncadd [#allocation11], 0
      %s24 = sshll.u32 %s0, 4
      %s25 = int_to_ptr.hbm [resolvable:$true] %s24
      %s26 = sshll.u32 [#allocation10], 4
      %s27 = int_to_ptr.vmem [resolvable:$true] %s26
      %32 = dma.hbm_to_vmem [thread:$0]  %s25, 1024, %s27, [#allocation11], 128, 128, 8
    $region5: #{tpu_custom_call.1} parent=1 // pred_fallthru
      _
    // Predicated region
    $region6: #{tpu_custom_call.1} parent=1 // pred_check
      _
    $region7: #{tpu_custom_call.1} parent=1 // pred_check_branch
      %34 = sbr.rel (0) target = $region9
    $region8: #{tpu_custom_call.1} parent=1 // pred_region
      %36 = vsyncadd [#allocation13], 0
      %s37 = sshll.u32 %s1, 4
      %s38 = int_to_ptr.hbm [resolvable:$true] %s37
      %s39 = sshll.u32 [#allocation12], 4
      %s40 = int_to_ptr.vmem [resolvable:$true] %s39
      %45 = dma.hbm_to_vmem [thread:$0]  %s38, 3072, %s40, [#allocation13], 384, 384, 24
    $region9: #{tpu_custom_call.1} parent=1 // pred_fallthru
      _
    // Predicated region
    $region10: #{tpu_custom_call.1} parent=1 // pred_check
      _
    $region11: #{tpu_custom_call.1} parent=1 // pred_check_branch
      %47 = sbr.rel (0) target = $region13
    $region12: #{tpu_custom_call.1} parent=1 // pred_region
      _
    $region13: #{tpu_custom_call.1} parent=1 // pred_fallthru
      _
    // Predicated region
    $region14: #{tpu_custom_call.1} parent=1 // pred_check
      _
    $region15: #{tpu_custom_call.1} parent=1 // pred_check_branch
      %49 = sbr.rel (0) target = $region17
    $region16: #{tpu_custom_call.1} parent=1 // pred_region
      %51 = vsyncadd [#allocation13], 0
      %s52 = sshll.u32 %s3, 4
      %s53 = int_to_ptr.hbm [resolvable:$true] %s52
      %s54 = sshll.u32 [#allocation14], 4
      %s55 = int_to_ptr.vmem [resolvable:$true] %s54
      %60 = dma.hbm_to_vmem [thread:$0]  %s53, 2048, %s55, [#allocation13], 256, 256, 16
    $region17: #{tpu_custom_call.1} parent=1 // pred_fallthru
      _
    // Predicated region
    $region18: #{tpu_custom_call.1} parent=1 // pred_check
      _
    $region19: #{tpu_custom_call.1} parent=1 // pred_check_branch
      %62 = sbr.rel (0) target = $region21
    $region20: #{tpu_custom_call.1} parent=1 // pred_region
      _
    $region21: #{tpu_custom_call.1} parent=1 // pred_fallthru
      _
    // Predicated region
    $region22: #{tpu_custom_call.1} parent=1 // pred_check
      _
    $region23: #{tpu_custom_call.1} parent=1 // pred_check_branch
      %64 = sbr.rel (0) target = $region25
    $region24: #{tpu_custom_call.1} parent=1 // pred_region
      _
    $region25: #{tpu_custom_call.1} parent=1 // pred_fallthru
      _
    // Predicated region
    $region26: #{tpu_custom_call.1} parent=1 // pred_check
      _
    $region27: #{tpu_custom_call.1} parent=1 // pred_check_branch
      %66 = sbr.rel (0) target = $region29
    $region28: #{tpu_custom_call.1} parent=1 // pred_region
      _
    $region29: #{tpu_custom_call.1} parent=1 // pred_fallthru
      _
    // Predicated region
    $region30: #{tpu_custom_call.1} parent=1 // pred_check
      _
    $region31: #{tpu_custom_call.1} parent=1 // pred_check_branch
      %68 = sbr.rel (0) target = $region33
    $region32: #{tpu_custom_call.1} parent=1 // pred_region
      _
    $region33: #{tpu_custom_call.1} parent=1 // pred_fallthru
      _
    // Predicated region
    $region34: #{tpu_custom_call.1} parent=1 // pred_check
      _
    $region35: #{tpu_custom_call.1} parent=1 // pred_check_branch
      %70 = sbr.rel (0) target = $region37
    $region36: #{tpu_custom_call.1} parent=1 // pred_region
      _
    $region37: #{tpu_custom_call.1} parent=1 // pred_fallthru
      _
    // Predicated region
    $region38: #{tpu_custom_call.1} parent=1 // pred_check
      _
    $region39: #{tpu_custom_call.1} parent=1 // pred_check_branch
      %72 = sbr.rel (0) target = $region41
    $region40: #{tpu_custom_call.1} parent=1 // pred_region
      %74 = dma.done [#allocation11], 1024
    $region41: #{tpu_custom_call.1} parent=1 // pred_fallthru
      _
    // Predicated region
    $region42: #{tpu_custom_call.1} parent=1 // pred_check
      _
    $region43: #{tpu_custom_call.1} parent=1 // pred_check_branch
      %76 = sbr.rel (0) target = $region45
    $region44: #{tpu_custom_call.1} parent=1 // pred_region
      %78 = dma.done [#allocation13], 3072
    $region45: #{tpu_custom_call.1} parent=1 // pred_fallthru
      _
    // Predicated region
    $region46: #{tpu_custom_call.1} parent=1 // pred_check
      _
    $region47: #{tpu_custom_call.1} parent=1 // pred_check_branch
      %80 = sbr.rel (0) target = $region49
    $region48: #{tpu_custom_call.1} parent=1 // pred_region
      %82 = dma.done [#allocation13], 2048
    $region49: #{tpu_custom_call.1} parent=1 // pred_fallthru
      _
    %p83 = scmp.eq.s32.totalorder 0, 0
    // Predicated region
    $region50: #{tpu_custom_call.1} parent=1 // pred_check
      %p84 = pneg %p83
    $region51: #{tpu_custom_call.1} parent=1 // pred_check_branch
      %86 = sbr.rel (%p84) target = $region53
    $region52: #{tpu_custom_call.1} parent=1 // pred_region
      %vm87 = vcmask 523264
      %88 = vst.msk [vmem:[#allocation3] sm:$0xff] %vm87, 0.0
      %89 = vst.msk [vmem:[#allocation4] sm:$0xff] %vm87, 0.0
      %vm90 = vcmask 7168
      %91 = vst.msk [vmem:[#allocation5] sm:$0xff] %vm90, -inf
      %92 = vst.msk [vmem:[#allocation6] sm:$0xff] %vm90, 0.0
      %93 = vst.msk [vmem:[#allocation7] sm:$0xff] %vm87, 0.0
    $region53: #{tpu_custom_call.1} parent=1 // pred_fallthru
      _
    %v94 = vld [vmem:[#allocation10] sm:$0xff]
    %v95 = vld [vmem:[#allocation10 + $0x8] sm:$0xff]
    %v96 = vld [vmem:[#allocation10 + $0x10] sm:$0xff]
    %v97 = vld [vmem:[#allocation10 + $0x18] sm:$0xff]
    %v98 = vld [vmem:[#allocation10 + $0x20] sm:$0xff]
    %v99 = vld [vmem:[#allocation10 + $0x28] sm:$0xff]
    %v100 = vld [vmem:[#allocation10 + $0x30] sm:$0xff]
    %v101 = vld [vmem:[#allocation10 + $0x38] sm:$0xff]
    %v102 = vld [vmem:[#allocation12] sm:$0xff]
    %v103 = vld [vmem:[#allocation12 + $0x8] sm:$0xff]
    %v104 = vld [vmem:[#allocation12 + $0x10] sm:$0xff]
    %v105 = vld [vmem:[#allocation12 + $0x18] sm:$0xff]
    %v106 = vld [vmem:[#allocation12 + $0x20] sm:$0xff]
    %v107 = vld [vmem:[#allocation12 + $0x28] sm:$0xff]
    %v108 = vld [vmem:[#allocation12 + $0x30] sm:$0xff]
    %v109 = vld [vmem:[#allocation12 + $0x38] sm:$0xff]
    %v110 = vld [vmem:[#allocation12 + $0x40] sm:$0xff]
    %v111 = vld [vmem:[#allocation12 + $0x48] sm:$0xff]
    %v112 = vld [vmem:[#allocation12 + $0x50] sm:$0xff]
    %v113 = vld [vmem:[#allocation12 + $0x58] sm:$0xff]
    %v114 = vld [vmem:[#allocation12 + $0x60] sm:$0xff]
    %v115 = vld [vmem:[#allocation12 + $0x68] sm:$0xff]
    %v116 = vld [vmem:[#allocation12 + $0x70] sm:$0xff]
    %v117 = vld [vmem:[#allocation12 + $0x78] sm:$0xff]
    %v118 = vld [vmem:[#allocation12 + $0x80] sm:$0xff]
    %v119 = vld [vmem:[#allocation12 + $0x88] sm:$0xff]
    %v120 = vld [vmem:[#allocation12 + $0x90] sm:$0xff]
    %v121 = vld [vmem:[#allocation12 + $0x98] sm:$0xff]
    %v122 = vld [vmem:[#allocation12 + $0xa0] sm:$0xff]
    %v123 = vld [vmem:[#allocation12 + $0xa8] sm:$0xff]
    %v124 = vld [vmem:[#allocation12 + $0xb0] sm:$0xff]
    %v125 = vld [vmem:[#allocation12 + $0xb8] sm:$0xff]
    %v126 = vld [vmem:[%s2] sm:$0x7]
    %v128 = vperm.slane %v126, 0
    %v129 = vperm.slane %v126, 1
    %v130 = vperm.slane %v126, 2
    %vm134 = vcmask 523264
    %v136 = vsel %vm134, %v94, 0
    %v139 = vsel %vm134, %v95, 0
    %v142 = vsel %vm134, %v96, 0
    %v145 = vsel %vm134, %v97, 0
    %v148 = vsel %vm134, %v98, 0
    %v151 = vsel %vm134, %v99, 0
    %v154 = vsel %vm134, %v100, 0
    %v157 = vsel %vm134, %v101, 0
    %159 = vmatpush.msra.mxu0 0.0
    %160 = vmatpush.msra.mxu0 0.0
    %161 = vmatpush.msra.mxu0 0.0
    %162 = vmatpush.msra.mxu0 0.0
    %163 = vmatpush.msra.mxu0 0.0
    %164 = vmatpush.msra.mxu0 0.0
    %165 = vmatpush.msra.mxu0 0.0
    %166 = vmatpush.msra.mxu0 0.0
    %167 = vmatpush.msra.mxu0 %v123
    %168 = vmatpush.msra.mxu0 %v120
    %169 = vmatpush.msra.mxu0 %v117
    %170 = vmatpush.msra.mxu0 %v114
    %171 = vmatpush.msra.mxu0 %v111
    %172 = vmatpush.msra.mxu0 %v108
    %173 = vmatpush.msra.mxu0 %v105
    %174 = vmatpush.msra.mxu0 %v102
    %175 = vmatmul.f32.gmra.mxu0 %v136
    %v176 = vpop.f32.mrf.mxu0
    %v177 = vadd.f32 %v128, %v176
    %178 = vmatmul.f32.gmra.mxu0 %v139
    %v179 = vpop.f32.mrf.mxu0
    %v180 = vadd.f32 %v128, %v179
    %181 = vmatmul.f32.gmra.mxu0 %v142
    %v182 = vpop.f32.mrf.mxu0
    %v183 = vadd.f32 %v128, %v182
    %184 = vmatmul.f32.gmra.mxu0 %v145
    %v185 = vpop.f32.mrf.mxu0
    %v186 = vadd.f32 %v128, %v185
    %187 = vmatmul.f32.gmra.mxu0 %v148
    %v188 = vpop.f32.mrf.mxu0
    %v189 = vadd.f32 %v128, %v188
    %190 = vmatmul.f32.gmra.mxu0 %v151
    %v191 = vpop.f32.mrf.mxu0
    %v192 = vadd.f32 %v128, %v191
    %193 = vmatmul.f32.gmra.mxu0 %v154
    %v194 = vpop.f32.mrf.mxu0
    %v195 = vadd.f32 %v128, %v194
    %196 = vmatmul.f32.gmra.mxu0 %v157
    %v197 = vpop.f32.mrf.mxu0
    %v198 = vadd.f32 %v128, %v197
    %199 = vdwg.mxu0
    %200 = vmatpush.msra.mxu0 0.0
    %201 = vmatpush.msra.mxu0 0.0
    %202 = vmatpush.msra.mxu0 0.0
    %203 = vmatpush.msra.mxu0 0.0
    %204 = vmatpush.msra.mxu0 0.0
    %205 = vmatpush.msra.mxu0 0.0
    %206 = vmatpush.msra.mxu0 0.0
    %207 = vmatpush.msra.mxu0 0.0
    %208 = vmatpush.msra.mxu0 %v124
    %209 = vmatpush.msra.mxu0 %v121
    %210 = vmatpush.msra.mxu0 %v118
    %211 = vmatpush.msra.mxu0 %v115
    %212 = vmatpush.msra.mxu0 %v112
    %213 = vmatpush.msra.mxu0 %v109
    %214 = vmatpush.msra.mxu0 %v106
    %215 = vmatpush.msra.mxu0 %v103
    %216 = vmatmul.f32.gmra.mxu0 %v136
    %v217 = vpop.f32.mrf.mxu0
    %v218 = vadd.f32 %v129, %v217
    %219 = vmatmul.f32.gmra.mxu0 %v139
    %v220 = vpop.f32.mrf.mxu0
    %v221 = vadd.f32 %v129, %v220
    %222 = vmatmul.f32.gmra.mxu0 %v142
    %v223 = vpop.f32.mrf.mxu0
    %v224 = vadd.f32 %v129, %v223
    %225 = vmatmul.f32.gmra.mxu0 %v145
    %v226 = vpop.f32.mrf.mxu0
    %v227 = vadd.f32 %v129, %v226
    %228 = vmatmul.f32.gmra.mxu0 %v148
    %v229 = vpop.f32.mrf.mxu0
    %v230 = vadd.f32 %v129, %v229
    %231 = vmatmul.f32.gmra.mxu0 %v151
    %v232 = vpop.f32.mrf.mxu0
    %v233 = vadd.f32 %v129, %v232
    %234 = vmatmul.f32.gmra.mxu0 %v154
    %v235 = vpop.f32.mrf.mxu0
    %v236 = vadd.f32 %v129, %v235
    %237 = vmatmul.f32.gmra.mxu0 %v157
    %v238 = vpop.f32.mrf.mxu0
    %v239 = vadd.f32 %v129, %v238
    %240 = vdwg.mxu0
    %241 = vmatpush.msra.mxu0 0.0
    %242 = vmatpush.msra.mxu0 0.0
    %243 = vmatpush.msra.mxu0 0.0
    %244 = vmatpush.msra.mxu0 0.0
    %245 = vmatpush.msra.mxu0 0.0
    %246 = vmatpush.msra.mxu0 0.0
    %247 = vmatpush.msra.mxu0 0.0
    %248 = vmatpush.msra.mxu0 0.0
    %249 = vmatpush.msra.mxu0 %v125
    %250 = vmatpush.msra.mxu0 %v122
    %251 = vmatpush.msra.mxu0 %v119
    %252 = vmatpush.msra.mxu0 %v116
    %253 = vmatpush.msra.mxu0 %v113
    %254 = vmatpush.msra.mxu0 %v110
    %255 = vmatpush.msra.mxu0 %v107
    %256 = vmatpush.msra.mxu0 %v104
    %257 = vmatmul.f32.gmra.mxu0 %v136
    %v258 = vpop.f32.mrf.mxu0
    %v259 = vadd.f32 %v130, %v258
    %260 = vmatmul.f32.gmra.mxu0 %v139
    %v261 = vpop.f32.mrf.mxu0
    %v262 = vadd.f32 %v130, %v261
    %263 = vmatmul.f32.gmra.mxu0 %v142
    %v264 = vpop.f32.mrf.mxu0
    %v265 = vadd.f32 %v130, %v264
    %266 = vmatmul.f32.gmra.mxu0 %v145
    %v267 = vpop.f32.mrf.mxu0
    %v268 = vadd.f32 %v130, %v267
    %269 = vmatmul.f32.gmra.mxu0 %v148
    %v270 = vpop.f32.mrf.mxu0
    %v271 = vadd.f32 %v130, %v270
    %272 = vmatmul.f32.gmra.mxu0 %v151
    %v273 = vpop.f32.mrf.mxu0
    %v274 = vadd.f32 %v130, %v273
    %275 = vmatmul.f32.gmra.mxu0 %v154
    %v276 = vpop.f32.mrf.mxu0
    %v277 = vadd.f32 %v130, %v276
    %278 = vmatmul.f32.gmra.mxu0 %v157
    %v279 = vpop.f32.mrf.mxu0
    %v280 = vadd.f32 %v130, %v279
    %281 = vdwg.mxu0
    %282 = vst [vmem:[#allocation2] sm:$0xff] %v177
    %283 = vst [vmem:[#allocation2 + $0x8] sm:$0xff] %v218
    %284 = vst [vmem:[#allocation2 + $0x10] sm:$0xff] %v180
    %285 = vst [vmem:[#allocation2 + $0x18] sm:$0xff] %v221
    %286 = vst [vmem:[#allocation2 + $0x20] sm:$0xff] %v183
    %287 = vst [vmem:[#allocation2 + $0x28] sm:$0xff] %v224
    %288 = vst [vmem:[#allocation2 + $0x30] sm:$0xff] %v186
    %289 = vst [vmem:[#allocation2 + $0x38] sm:$0xff] %v227
    %290 = vst [vmem:[#allocation2 + $0x40] sm:$0xff] %v189
    %291 = vst [vmem:[#allocation2 + $0x48] sm:$0xff] %v230
    %292 = vst [vmem:[#allocation2 + $0x50] sm:$0xff] %v192
    %293 = vst [vmem:[#allocation2 + $0x58] sm:$0xff] %v233
    %294 = vst [vmem:[#allocation2 + $0x60] sm:$0xff] %v195
    %295 = vst [vmem:[#allocation2 + $0x68] sm:$0xff] %v236
    %296 = vst [vmem:[#allocation2 + $0x70] sm:$0xff] %v198
    %297 = vst [vmem:[#allocation2 + $0x78] sm:$0xff] %v239
    %v298 = vmax.f32 %v259, 0.0
    %v299 = vmax.f32 %v262, 0.0
    %v300 = vmax.f32 %v265, 0.0
    %v301 = vmax.f32 %v268, 0.0
    %v302 = vmax.f32 %v271, 0.0
    %v303 = vmax.f32 %v274, 0.0
    %v304 = vmax.f32 %v277, 0.0
    %v305 = vmax.f32 %v280, 0.0
    %v306 = vld [vmem:[%s4] sm:$0x1]
    %v308 = vperm.slane %v306, 0
    %v310 = vmul.f32 %v298, %v308
    %v311 = vmul.f32 %v299, %v308
    %v312 = vmul.f32 %v300, %v308
    %v313 = vmul.f32 %v301, %v308
    %v314 = vmul.f32 %v302, %v308
    %v315 = vmul.f32 %v303, %v308
    %v316 = vmul.f32 %v304, %v308
    %v317 = vmul.f32 %v305, %v308
    %v318 = vsel %vm134, %v310, 0.0
    %319 = vadd.xlane.f32.xlu0 %v318
    %v320 = vpop.xlane.xlu0 %319
    %v321 = vsel %vm134, %v311, 0.0
    %322 = vadd.xlane.f32.xlu0 %v321
    %v323 = vpop.xlane.xlu0 %322
    %v324 = vsel %vm134, %v312, 0.0
    %325 = vadd.xlane.f32.xlu0 %v324
    %v326 = vpop.xlane.xlu0 %325
    %v327 = vsel %vm134, %v313, 0.0
    %328 = vadd.xlane.f32.xlu0 %v327
    %v329 = vpop.xlane.xlu0 %328
    %v330 = vsel %vm134, %v314, 0.0
    %331 = vadd.xlane.f32.xlu0 %v330
    %v332 = vpop.xlane.xlu0 %331
    %v333 = vsel %vm134, %v315, 0.0
    %334 = vadd.xlane.f32.xlu0 %v333
    %v335 = vpop.xlane.xlu0 %334
    %v336 = vsel %vm134, %v316, 0.0
    %337 = vadd.xlane.f32.xlu0 %v336
    %v338 = vpop.xlane.xlu0 %337
    %v339 = vsel %vm134, %v317, 0.0
    %340 = vadd.xlane.f32.xlu0 %v339
    %v341 = vpop.xlane.xlu0 %340
    %v342 = vld [vmem:[#allocation8] sm:$0x1]
    %v344 = vperm.slane %v342, 0
    %v346 = vadd.f32 %v320, %v344
    %v347 = vadd.f32 %v323, %v344
    %v348 = vadd.f32 %v326, %v344
    %v349 = vadd.f32 %v329, %v344
    %v350 = vadd.f32 %v332, %v344
    %v351 = vadd.f32 %v335, %v344
    %v352 = vadd.f32 %v338, %v344
    %v353 = vadd.f32 %v341, %v344
    %v354 = vxor.u32 %v346, 2147483648
    %v355 = vxor.u32 %v347, 2147483648
    %v356 = vxor.u32 %v348, 2147483648
    %v357 = vxor.u32 %v349, 2147483648
    %v358 = vxor.u32 %v350, 2147483648
    %v359 = vxor.u32 %v351, 2147483648
    %v360 = vxor.u32 %v352, 2147483648
    %v361 = vxor.u32 %v353, 2147483648
    %v362 = vmul.f32 %v354, 1.442695
    %v363 = vpow.pop %v362
    %v364 = vmul.f32 %v355, 1.442695
    %v365 = vpow.pop %v364
    %v366 = vmul.f32 %v356, 1.442695
    %v367 = vpow.pop %v366
    %v368 = vmul.f32 %v357, 1.442695
    %v369 = vpow.pop %v368
    %v370 = vmul.f32 %v358, 1.442695
    %v371 = vpow.pop %v370
    %v372 = vmul.f32 %v359, 1.442695
    %v373 = vpow.pop %v372
    %v374 = vmul.f32 %v360, 1.442695
    %v375 = vpow.pop %v374
    %v376 = vmul.f32 %v361, 1.442695
    %v377 = vpow.pop %v376
    %v378 = vadd.f32 %v363, 1.0
    %v379 = vadd.f32 %v365, 1.0
    %v380 = vadd.f32 %v367, 1.0
    %v381 = vadd.f32 %v369, 1.0
    %v382 = vadd.f32 %v371, 1.0
    %v383 = vadd.f32 %v373, 1.0
    %v384 = vadd.f32 %v375, 1.0
    %v385 = vadd.f32 %v377, 1.0
    %v386 = vrcp.pop %v378
    %v387 = vmul.f32 %v378, %v386
    %v388 = vsub.f32 1.0, %v387
    %v389 = vmul.f32 %v386, %v388
    %v390 = vadd.f32 %v386, %v389
    %vm391 = vweird.f32 %v378
    %vm392 = vweird.f32 %v386
    %vm393 = vmor %vm391, %vm392
    %v394 = vsel %vm393, %v386, %v390
    %v395 = vand.u32 2147483647, %v378
    %vm396 = vcmp.eq.f32.partialorder %v395, 8.507059e+37
    %v397 = vand.u32 %v378, 2147483648
    %v398 = vor.u32 1.1754944e-38, %v397
    %v399 = vsel %vm396, %v398, %v394
    %v400 = vmul.f32 1.0, %v399
    %v401 = vrcp.pop %v379
    %v402 = vmul.f32 %v379, %v401
    %v403 = vsub.f32 1.0, %v402
    %v404 = vmul.f32 %v401, %v403
    %v405 = vadd.f32 %v401, %v404
    %vm406 = vweird.f32 %v379
    %vm407 = vweird.f32 %v401
    %vm408 = vmor %vm406, %vm407
    %v409 = vsel %vm408, %v401, %v405
    %v410 = vand.u32 2147483647, %v379
    %vm411 = vcmp.eq.f32.partialorder %v410, 8.507059e+37
    %v412 = vand.u32 %v379, 2147483648
    %v413 = vor.u32 1.1754944e-38, %v412
    %v414 = vsel %vm411, %v413, %v409
    %v415 = vmul.f32 1.0, %v414
    %v416 = vrcp.pop %v380
    %v417 = vmul.f32 %v380, %v416
    %v418 = vsub.f32 1.0, %v417
    %v419 = vmul.f32 %v416, %v418
    %v420 = vadd.f32 %v416, %v419
    %vm421 = vweird.f32 %v380
    %vm422 = vweird.f32 %v416
    %vm423 = vmor %vm421, %vm422
    %v424 = vsel %vm423, %v416, %v420
    %v425 = vand.u32 2147483647, %v380
    %vm426 = vcmp.eq.f32.partialorder %v425, 8.507059e+37
    %v427 = vand.u32 %v380, 2147483648
    %v428 = vor.u32 1.1754944e-38, %v427
    %v429 = vsel %vm426, %v428, %v424
    %v430 = vmul.f32 1.0, %v429
    %v431 = vrcp.pop %v381
    %v432 = vmul.f32 %v381, %v431
    %v433 = vsub.f32 1.0, %v432
    %v434 = vmul.f32 %v431, %v433
    %v435 = vadd.f32 %v431, %v434
    %vm436 = vweird.f32 %v381
    %vm437 = vweird.f32 %v431
    %vm438 = vmor %vm436, %vm437
    %v439 = vsel %vm438, %v431, %v435
    %v440 = vand.u32 2147483647, %v381
    %vm441 = vcmp.eq.f32.partialorder %v440, 8.507059e+37
    %v442 = vand.u32 %v381, 2147483648
    %v443 = vor.u32 1.1754944e-38, %v442
    %v444 = vsel %vm441, %v443, %v439
    %v445 = vmul.f32 1.0, %v444
    %v446 = vrcp.pop %v382
    %v447 = vmul.f32 %v382, %v446
    %v448 = vsub.f32 1.0, %v447
    %v449 = vmul.f32 %v446, %v448
    %v450 = vadd.f32 %v446, %v449
    %vm451 = vweird.f32 %v382
    %vm452 = vweird.f32 %v446
    %vm453 = vmor %vm451, %vm452
    %v454 = vsel %vm453, %v446, %v450
    %v455 = vand.u32 2147483647, %v382
    %vm456 = vcmp.eq.f32.partialorder %v455, 8.507059e+37
    %v457 = vand.u32 %v382, 2147483648
    %v458 = vor.u32 1.1754944e-38, %v457
    %v459 = vsel %vm456, %v458, %v454
    %v460 = vmul.f32 1.0, %v459
    %v461 = vrcp.pop %v383
    %v462 = vmul.f32 %v383, %v461
    %v463 = vsub.f32 1.0, %v462
    %v464 = vmul.f32 %v461, %v463
    %v465 = vadd.f32 %v461, %v464
    %vm466 = vweird.f32 %v383
    %vm467 = vweird.f32 %v461
    %vm468 = vmor %vm466, %vm467
    %v469 = vsel %vm468, %v461, %v465
    %v470 = vand.u32 2147483647, %v383
    %vm471 = vcmp.eq.f32.partialorder %v470, 8.507059e+37
    %v472 = vand.u32 %v383, 2147483648
    %v473 = vor.u32 1.1754944e-38, %v472
    %v474 = vsel %vm471, %v473, %v469
    %v475 = vmul.f32 1.0, %v474
    %v476 = vrcp.pop %v384
    %v477 = vmul.f32 %v384, %v476
    %v478 = vsub.f32 1.0, %v477
    %v479 = vmul.f32 %v476, %v478
    %v480 = vadd.f32 %v476, %v479
    %vm481 = vweird.f32 %v384
    %vm482 = vweird.f32 %v476
    %vm483 = vmor %vm481, %vm482
    %v484 = vsel %vm483, %v476, %v480
    %v485 = vand.u32 2147483647, %v384
    %vm486 = vcmp.eq.f32.partialorder %v485, 8.507059e+37
    %v487 = vand.u32 %v384, 2147483648
    %v488 = vor.u32 1.1754944e-38, %v487
    %v489 = vsel %vm486, %v488, %v484
    %v490 = vmul.f32 1.0, %v489
    %v491 = vrcp.pop %v385
    %v492 = vmul.f32 %v385, %v491
    %v493 = vsub.f32 1.0, %v492
    %v494 = vmul.f32 %v491, %v493
    %v495 = vadd.f32 %v491, %v494
    %vm496 = vweird.f32 %v385
    %vm497 = vweird.f32 %v491
    %vm498 = vmor %vm496, %vm497
    %v499 = vsel %vm498, %v491, %v495
    %v500 = vand.u32 2147483647, %v385
    %vm501 = vcmp.eq.f32.partialorder %v500, 8.507059e+37
    %v502 = vand.u32 %v385, 2147483648
    %v503 = vor.u32 1.1754944e-38, %v502
    %v504 = vsel %vm501, %v503, %v499
    %v505 = vmul.f32 1.0, %v504
    %v506 = vld [vmem:[#allocation5] sm:$0xff]
    %vm507 = vcmask 7168
    %v508 = vsel %vm507, %v400, -inf
    %v509 = vsel %vm507, %v415, -inf
    %v510 = vsel %vm507, %v430, -inf
    %v511 = vsel %vm507, %v445, -inf
    %v512 = vsel %vm507, %v460, -inf
    %v513 = vmax.f32 %v508, %v512
    %v514 = vsel %vm507, %v475, -inf
    %v515 = vmax.f32 %v509, %v514
    %v516 = vsel %vm507, %v490, -inf
    %v517 = vmax.f32 %v510, %v516
    %v518 = vsel %vm507, %v505, -inf
    %v519 = vmax.f32 %v511, %v518
    %v520 = vmax.f32 %v513, %v515
    %v521 = vmax.f32 %v517, %v519
    %v522 = vmax.f32 %v520, %v521
    %v523 = vmax.f32 %v506, %v522
    %v524 = vsub.f32 %v506, %v523
    %v525 = vmul.f32 %v524, 1.442695
    %v526 = vpow.pop %v525
    %v527 = vsub.f32 %v400, %v523
    %v528 = vsub.f32 %v415, %v523
    %v529 = vsub.f32 %v430, %v523
    %v530 = vsub.f32 %v445, %v523
    %v531 = vsub.f32 %v460, %v523
    %v532 = vsub.f32 %v475, %v523
    %v533 = vsub.f32 %v490, %v523
    %v534 = vsub.f32 %v505, %v523
    %v535 = vmul.f32 %v527, 1.442695
    %v536 = vpow.pop %v535
    %v537 = vmul.f32 %v528, 1.442695
    %v538 = vpow.pop %v537
    %v539 = vmul.f32 %v529, 1.442695
    %v540 = vpow.pop %v539
    %v541 = vmul.f32 %v530, 1.442695
    %v542 = vpow.pop %v541
    %v543 = vmul.f32 %v531, 1.442695
    %v544 = vpow.pop %v543
    %v545 = vmul.f32 %v532, 1.442695
    %v546 = vpow.pop %v545
    %v547 = vmul.f32 %v533, 1.442695
    %v548 = vpow.pop %v547
    %v549 = vmul.f32 %v534, 1.442695
    %v550 = vpow.pop %v549
    %v551 = vld [vmem:[#allocation6] sm:$0xff]
    %v552 = vmul.f32 %v526, %v551
    %v553 = vsel %vm507, %v536, 0.0
    %v554 = vsel %vm507, %v538, 0.0
    %v555 = vadd.f32 %v553, %v554
    %v556 = vsel %vm507, %v540, 0.0
    %v557 = vadd.f32 %v555, %v556
    %v558 = vsel %vm507, %v542, 0.0
    %v559 = vadd.f32 %v557, %v558
    %v560 = vsel %vm507, %v544, 0.0
    %v561 = vadd.f32 %v559, %v560
    %v562 = vsel %vm507, %v546, 0.0
    %v563 = vadd.f32 %v561, %v562
    %v564 = vsel %vm507, %v548, 0.0
    %v565 = vadd.f32 %v563, %v564
    %v566 = vsel %vm507, %v550, 0.0
    %v567 = vadd.f32 %v565, %v566
    %v568 = vadd.f32 %v552, %v567
    %569 = vst.msk [vmem:[#allocation6] sm:$0xff] %vm507, %v568
    %v570 = vld [vmem:[#allocation7] sm:$0xff]
    %572 = vset.pattern.permute.xlu0 0
    %573 = vperm.xlu0 %572, %v526
    %v574 = vpop.permute.xlu0 %573
    %v576 = vmul.f32 %v574, %v570
    %578 = vset.pattern.permute.xlu0 0
    %579 = vperm.xlu0 %578, %v536
    %v580 = vpop.permute.xlu0 %579
    %583 = vset.pattern.permute.xlu0 0
    %584 = vperm.xlu0 %583, %v538
    %v585 = vpop.permute.xlu0 %584
    %588 = vset.pattern.permute.xlu0 0
    %589 = vperm.xlu0 %588, %v540
    %v590 = vpop.permute.xlu0 %589
    %593 = vset.pattern.permute.xlu0 0
    %594 = vperm.xlu0 %593, %v542
    %v595 = vpop.permute.xlu0 %594
    %598 = vset.pattern.permute.xlu0 0
    %599 = vperm.xlu0 %598, %v544
    %v600 = vpop.permute.xlu0 %599
    %603 = vset.pattern.permute.xlu0 0
    %604 = vperm.xlu0 %603, %v546
    %v605 = vpop.permute.xlu0 %604
    %608 = vset.pattern.permute.xlu0 0
    %609 = vperm.xlu0 %608, %v548
    %v610 = vpop.permute.xlu0 %609
    %613 = vset.pattern.permute.xlu0 0
    %614 = vperm.xlu0 %613, %v550
    %v615 = vpop.permute.xlu0 %614
    %v617 = vmul.f32 %v580, %v259
    %v618 = vmul.f32 %v585, %v262
    %v619 = vmul.f32 %v590, %v265
    %v620 = vmul.f32 %v595, %v268
    %v621 = vmul.f32 %v600, %v271
    %v622 = vmul.f32 %v605, %v274
    %v623 = vmul.f32 %v610, %v277
    %v624 = vmul.f32 %v615, %v280
    %vm625 = vcmask 1048064
    %v626 = vsel %vm625, %v617, 0.0
    %v627 = vsel %vm625, %v618, 0.0
    %v628 = vadd.f32 %v626, %v627
    %v629 = vsel %vm625, %v619, 0.0
    %v630 = vadd.f32 %v628, %v629
    %v631 = vsel %vm625, %v620, 0.0
    %v632 = vadd.f32 %v630, %v631
    %v633 = vsel %vm625, %v621, 0.0
    %v634 = vadd.f32 %v632, %v633
    %v635 = vsel %vm625, %v622, 0.0
    %v636 = vadd.f32 %v634, %v635
    %v637 = vsel %vm625, %v623, 0.0
    %v638 = vadd.f32 %v636, %v637
    %v639 = vsel %vm625, %v624, 0.0
    %v640 = vadd.f32 %v638, %v639
    %642 = vrot.lane.b32.xlu0 %v640, 64
    %v643 = vpop.permute.xlu0 %642
    %v645 = vadd.f32 %v576, %v643
    %646 = vst.msk [vmem:[#allocation7] sm:$0xff] %vm134, %v645
    %647 = vst.msk [vmem:[#allocation5] sm:$0xff] %vm507, %v523
    %v648 = vld [vmem:[#allocation3] sm:$0xff]
    %v649 = vld [vmem:[#allocation4] sm:$0xff]
    %s650 = smul.u32 0, 2
    %s651 = smul.addr %s650, 8
    %s652 = scalar_lea.vmem [#allocation2], %s651
    %v653 = vld [vmem:[%s652] sm:$0xff]
    %v654 = vld [vmem:[%s652 + $0x8] sm:$0xff]
    %v655 = vld [vmem:[#allocation14] sm:$0xff]
    %v656 = vld [vmem:[#allocation14 + $0x8] sm:$0xff]
    %v657 = vld [vmem:[#allocation14 + $0x10] sm:$0xff]
    %v658 = vld [vmem:[#allocation14 + $0x18] sm:$0xff]
    %v659 = vld [vmem:[#allocation14 + $0x20] sm:$0xff]
    %v660 = vld [vmem:[#allocation14 + $0x28] sm:$0xff]
    %v661 = vld [vmem:[#allocation14 + $0x30] sm:$0xff]
    %v662 = vld [vmem:[#allocation14 + $0x38] sm:$0xff]
    %v663 = vld [vmem:[#allocation14 + $0x40] sm:$0xff]
    %v664 = vld [vmem:[#allocation14 + $0x48] sm:$0xff]
    %v665 = vld [vmem:[#allocation14 + $0x50] sm:$0xff]
    %v666 = vld [vmem:[#allocation14 + $0x58] sm:$0xff]
    %v667 = vld [vmem:[#allocation14 + $0x60] sm:$0xff]
    %v668 = vld [vmem:[#allocation14 + $0x68] sm:$0xff]
    %v669 = vld [vmem:[#allocation14 + $0x70] sm:$0xff]
    %v670 = vld [vmem:[#allocation14 + $0x78] sm:$0xff]
    %v672 = vsel %vm134, %v648, 0
    %674 = vmatpush.msra.mxu0 0.0
    %675 = vmatpush.msra.mxu0 0.0
    %676 = vmatpush.msra.mxu0 0.0
    %677 = vmatpush.msra.mxu0 0.0
    %678 = vmatpush.msra.mxu0 0.0
    %679 = vmatpush.msra.mxu0 0.0
    %680 = vmatpush.msra.mxu0 0.0
    %681 = vmatpush.msra.mxu0 0.0
    %682 = vmatpush.msra.mxu0 %v669
    %683 = vmatpush.msra.mxu0 %v667
    %684 = vmatpush.msra.mxu0 %v665
    %685 = vmatpush.msra.mxu0 %v663
    %686 = vmatpush.msra.mxu0 %v661
    %687 = vmatpush.msra.mxu0 %v659
    %688 = vmatpush.msra.mxu0 %v657
    %689 = vmatpush.msra.mxu0 %v655
    %690 = vmatmul.f32.gmra.mxu0 %v672
    %v691 = vpop.f32.mrf.mxu0
    %v692 = vadd.f32 0.0, %v691
    %693 = vdwg.mxu0
    %694 = vmatpush.msra.mxu0 0.0
    %695 = vmatpush.msra.mxu0 0.0
    %696 = vmatpush.msra.mxu0 0.0
    %697 = vmatpush.msra.mxu0 0.0
    %698 = vmatpush.msra.mxu0 0.0
    %699 = vmatpush.msra.mxu0 0.0
    %700 = vmatpush.msra.mxu0 0.0
    %701 = vmatpush.msra.mxu0 0.0
    %702 = vmatpush.msra.mxu0 %v670
    %703 = vmatpush.msra.mxu0 %v668
    %704 = vmatpush.msra.mxu0 %v666
    %705 = vmatpush.msra.mxu0 %v664
    %706 = vmatpush.msra.mxu0 %v662
    %707 = vmatpush.msra.mxu0 %v660
    %708 = vmatpush.msra.mxu0 %v658
    %709 = vmatpush.msra.mxu0 %v656
    %710 = vmatmul.f32.gmra.mxu0 %v672
    %v711 = vpop.f32.mrf.mxu0
    %v712 = vadd.f32 0.0, %v711
    %713 = vdwg.mxu0
    %v714 = vadd.f32 %v653, %v692
    %v715 = vadd.f32 %v654, %v712
    %v716 = vxor.u32 %v714, 2147483648
    %v717 = vmul.f32 %v716, 1.442695
    %v718 = vpow.pop %v717
    %v719 = vadd.f32 %v718, 1.0
    %v720 = vrcp.pop %v719
    %v721 = vmul.f32 %v719, %v720
    %v722 = vsub.f32 1.0, %v721
    %v723 = vmul.f32 %v720, %v722
    %v724 = vadd.f32 %v720, %v723
    %vm725 = vweird.f32 %v719
    %vm726 = vweird.f32 %v720
    %vm727 = vmor %vm725, %vm726
    %v728 = vsel %vm727, %v720, %v724
    %v729 = vand.u32 2147483647, %v719
    %vm730 = vcmp.eq.f32.partialorder %v729, 8.507059e+37
    %v731 = vand.u32 %v719, 2147483648
    %v732 = vor.u32 1.1754944e-38, %v731
    %v733 = vsel %vm730, %v732, %v728
    %v734 = vmul.f32 1.0, %v733
    %v735 = vtanh.pop %v715
    %v736 = vxor.u32 %v715, 2147483648
    %v737 = vmul.f32 %v736, 1.442695
    %v738 = vpow.pop %v737
    %v739 = vadd.f32 %v738, 1.0
    %v740 = vrcp.pop %v739
    %v741 = vmul.f32 %v739, %v740
    %v742 = vsub.f32 1.0, %v741
    %v743 = vmul.f32 %v740, %v742
    %v744 = vadd.f32 %v740, %v743
    %vm745 = vweird.f32 %v739
    %vm746 = vweird.f32 %v740
    %vm747 = vmor %vm745, %vm746
    %v748 = vsel %vm747, %v740, %v744
    %v749 = vand.u32 2147483647, %v739
    %vm750 = vcmp.eq.f32.partialorder %v749, 8.507059e+37
    %v751 = vand.u32 %v739, 2147483648
    %v752 = vor.u32 1.1754944e-38, %v751
    %v753 = vsel %vm750, %v752, %v748
    %v754 = vmul.f32 1.0, %v753
    %756 = vrot.lane.b32.xlu0 %v649, 64
    %v757 = vpop.permute.xlu0 %756
    %v759 = vmul.f32 %v734, %v757
    %v760 = vmul.f32 %v734, %v735
    %762 = vrot.lane.b32.xlu0 %v760, 64
    %v763 = vpop.permute.xlu0 %762
    %v765 = vadd.f32 %v759, %v763
    %v766 = vtanh.pop %v765
    %v767 = vmul.f32 %v754, %v766
    %s768 = smul.u32 1, 2
    %s769 = smul.addr %s768, 8
    %s770 = scalar_lea.vmem [#allocation2], %s769
    %v771 = vld [vmem:[%s770] sm:$0xff]
    %v772 = vld [vmem:[%s770 + $0x8] sm:$0xff]
    %774 = vrot.lane.b32.xlu0 %v767, 64
    %v775 = vpop.permute.xlu0 %774
    %v776 = vsel %vm134, %v775, 0
    %778 = vmatpush.msra.mxu0 0.0
    %779 = vmatpush.msra.mxu0 0.0
    %780 = vmatpush.msra.mxu0 0.0
    %781 = vmatpush.msra.mxu0 0.0
    %782 = vmatpush.msra.mxu0 0.0
    %783 = vmatpush.msra.mxu0 0.0
    %784 = vmatpush.msra.mxu0 0.0
    %785 = vmatpush.msra.mxu0 0.0
    %786 = vmatpush.msra.mxu0 %v669
    %787 = vmatpush.msra.mxu0 %v667
    %788 = vmatpush.msra.mxu0 %v665
    %789 = vmatpush.msra.mxu0 %v663
    %790 = vmatpush.msra.mxu0 %v661
    %791 = vmatpush.msra.mxu0 %v659
    %792 = vmatpush.msra.mxu0 %v657
    %793 = vmatpush.msra.mxu0 %v655
    %794 = vmatmul.f32.gmra.mxu0 %v776
    %v795 = vpop.f32.mrf.mxu0
    %v796 = vadd.f32 0.0, %v795
    %797 = vdwg.mxu0
    %798 = vmatpush.msra.mxu0 0.0
    %799 = vmatpush.msra.mxu0 0.0
    %800 = vmatpush.msra.mxu0 0.0
    %801 = vmatpush.msra.mxu0 0.0
    %802 = vmatpush.msra.mxu0 0.0
    %803 = vmatpush.msra.mxu0 0.0
    %804 = vmatpush.msra.mxu0 0.0
    %805 = vmatpush.msra.mxu0 0.0
    %806 = vmatpush.msra.mxu0 %v670
    %807 = vmatpush.msra.mxu0 %v668
    %808 = vmatpush.msra.mxu0 %v666
    %809 = vmatpush.msra.mxu0 %v664
    %810 = vmatpush.msra.mxu0 %v662
    %811 = vmatpush.msra.mxu0 %v660
    %812 = vmatpush.msra.mxu0 %v658
    %813 = vmatpush.msra.mxu0 %v656
    %814 = vmatmul.f32.gmra.mxu0 %v776
    %v815 = vpop.f32.mrf.mxu0
    %v816 = vadd.f32 0.0, %v815
    %817 = vdwg.mxu0
    %v818 = vadd.f32 %v771, %v796
    %v819 = vadd.f32 %v772, %v816
    %v820 = vxor.u32 %v818, 2147483648
    %v821 = vmul.f32 %v820, 1.442695
    %v822 = vpow.pop %v821
    %v823 = vadd.f32 %v822, 1.0
    %v824 = vrcp.pop %v823
    %v825 = vmul.f32 %v823, %v824
    %v826 = vsub.f32 1.0, %v825
    %v827 = vmul.f32 %v824, %v826
    %v828 = vadd.f32 %v824, %v827
    %vm829 = vweird.f32 %v823
    %vm830 = vweird.f32 %v824
    %vm831 = vmor %vm829, %vm830
    %v832 = vsel %vm831, %v824, %v828
    %v833 = vand.u32 2147483647, %v823
    %vm834 = vcmp.eq.f32.partialorder %v833, 8.507059e+37
    %v835 = vand.u32 %v823, 2147483648
    %v836 = vor.u32 1.1754944e-38, %v835
    %v837 = vsel %vm834, %v836, %v832
    %v838 = vmul.f32 1.0, %v837
    %v839 = vtanh.pop %v819
    %v840 = vxor.u32 %v819, 2147483648
    %v841 = vmul.f32 %v840, 1.442695
    %v842 = vpow.pop %v841
    %v843 = vadd.f32 %v842, 1.0
    %v844 = vrcp.pop %v843
    %v845 = vmul.f32 %v843, %v844
    %v846 = vsub.f32 1.0, %v845
    %v847 = vmul.f32 %v844, %v846
    %v848 = vadd.f32 %v844, %v847
    %vm849 = vweird.f32 %v843
    %vm850 = vweird.f32 %v844
    %vm851 = vmor %vm849, %vm850
    %v852 = vsel %vm851, %v844, %v848
    %v853 = vand.u32 2147483647, %v843
    %vm854 = vcmp.eq.f32.partialorder %v853, 8.507059e+37
    %v855 = vand.u32 %v843, 2147483648
    %v856 = vor.u32 1.1754944e-38, %v855
    %v857 = vsel %vm854, %v856, %v852
    %v858 = vmul.f32 1.0, %v857
    %v859 = vmul.f32 %v838, %v765
    %v860 = vmul.f32 %v838, %v839
    %862 = vrot.lane.b32.xlu0 %v860, 64
    %v863 = vpop.permute.xlu0 %862
    %v865 = vadd.f32 %v859, %v863
    %v866 = vtanh.pop %v865
    %v867 = vmul.f32 %v858, %v866
    %s868 = smul.u32 2, 2
    %s869 = smul.addr %s868, 8
    %s870 = scalar_lea.vmem [#allocation2], %s869
    %v871 = vld [vmem:[%s870] sm:$0xff]
    %v872 = vld [vmem:[%s870 + $0x8] sm:$0xff]
    %874 = vrot.lane.b32.xlu0 %v867, 64
    %v875 = vpop.permute.xlu0 %874
    %v876 = vsel %vm134, %v875, 0
    %878 = vmatpush.msra.mxu0 0.0
    %879 = vmatpush.msra.mxu0 0.0
    %880 = vmatpush.msra.mxu0 0.0
    %881 = vmatpush.msra.mxu0 0.0
    %882 = vmatpush.msra.mxu0 0.0
    %883 = vmatpush.msra.mxu0 0.0
    %884 = vmatpush.msra.mxu0 0.0
    %885 = vmatpush.msra.mxu0 0.0
    %886 = vmatpush.msra.mxu0 %v669
    %887 = vmatpush.msra.mxu0 %v667
    %888 = vmatpush.msra.mxu0 %v665
    %889 = vmatpush.msra.mxu0 %v663
    %890 = vmatpush.msra.mxu0 %v661
    %891 = vmatpush.msra.mxu0 %v659
    %892 = vmatpush.msra.mxu0 %v657
    %893 = vmatpush.msra.mxu0 %v655
    %894 = vmatmul.f32.gmra.mxu0 %v876
    %v895 = vpop.f32.mrf.mxu0
    %v896 = vadd.f32 0.0, %v895
    %897 = vdwg.mxu0
    %898 = vmatpush.msra.mxu0 0.0
    %899 = vmatpush.msra.mxu0 0.0
    %900 = vmatpush.msra.mxu0 0.0
    %901 = vmatpush.msra.mxu0 0.0
    %902 = vmatpush.msra.mxu0 0.0
    %903 = vmatpush.msra.mxu0 0.0
    %904 = vmatpush.msra.mxu0 0.0
    %905 = vmatpush.msra.mxu0 0.0
    %906 = vmatpush.msra.mxu0 %v670
    %907 = vmatpush.msra.mxu0 %v668
    %908 = vmatpush.msra.mxu0 %v666
    %909 = vmatpush.msra.mxu0 %v664
    %910 = vmatpush.msra.mxu0 %v662
    %911 = vmatpush.msra.mxu0 %v660
    %912 = vmatpush.msra.mxu0 %v658
    %913 = vmatpush.msra.mxu0 %v656
    %914 = vmatmul.f32.gmra.mxu0 %v876
    %v915 = vpop.f32.mrf.mxu0
    %v916 = vadd.f32 0.0, %v915
    %917 = vdwg.mxu0
    %v918 = vadd.f32 %v871, %v896
    %v919 = vadd.f32 %v872, %v916
    %v920 = vxor.u32 %v918, 2147483648
    %v921 = vmul.f32 %v920, 1.442695
    %v922 = vpow.pop %v921
    %v923 = vadd.f32 %v922, 1.0
    %v924 = vrcp.pop %v923
    %v925 = vmul.f32 %v923, %v924
    %v926 = vsub.f32 1.0, %v925
    %v927 = vmul.f32 %v924, %v926
    %v928 = vadd.f32 %v924, %v927
    %vm929 = vweird.f32 %v923
    %vm930 = vweird.f32 %v924
    %vm931 = vmor %vm929, %vm930
    %v932 = vsel %vm931, %v924, %v928
    %v933 = vand.u32 2147483647, %v923
    %vm934 = vcmp.eq.f32.partialorder %v933, 8.507059e+37
    %v935 = vand.u32 %v923, 2147483648
    %v936 = vor.u32 1.1754944e-38, %v935
    %v937 = vsel %vm934, %v936, %v932
    %v938 = vmul.f32 1.0, %v937
    %v939 = vtanh.pop %v919
    %v940 = vxor.u32 %v919, 2147483648
    %v941 = vmul.f32 %v940, 1.442695
    %v942 = vpow.pop %v941
    %v943 = vadd.f32 %v942, 1.0
    %v944 = vrcp.pop %v943
    %v945 = vmul.f32 %v943, %v944
    %v946 = vsub.f32 1.0, %v945
    %v947 = vmul.f32 %v944, %v946
    %v948 = vadd.f32 %v944, %v947
    %vm949 = vweird.f32 %v943
    %vm950 = vweird.f32 %v944
    %vm951 = vmor %vm949, %vm950
    %v952 = vsel %vm951, %v944, %v948
    %v953 = vand.u32 2147483647, %v943
    %vm954 = vcmp.eq.f32.partialorder %v953, 8.507059e+37
    %v955 = vand.u32 %v943, 2147483648
    %v956 = vor.u32 1.1754944e-38, %v955
    %v957 = vsel %vm954, %v956, %v952
    %v958 = vmul.f32 1.0, %v957
    %v959 = vmul.f32 %v938, %v865
    %v960 = vmul.f32 %v938, %v939
    %962 = vrot.lane.b32.xlu0 %v960, 64
    %v963 = vpop.permute.xlu0 %962
    %v965 = vadd.f32 %v959, %v963
    %v966 = vtanh.pop %v965
    %v967 = vmul.f32 %v958, %v966
    %s968 = smul.u32 3, 2
    %s969 = smul.addr %s968, 8
    %s970 = scalar_lea.vmem [#allocation2], %s969
    %v971 = vld [vmem:[%s970] sm:$0xff]
    %v972 = vld [vmem:[%s970 + $0x8] sm:$0xff]
    %974 = vrot.lane.b32.xlu0 %v967, 64
    %v975 = vpop.permute.xlu0 %974
    %v976 = vsel %vm134, %v975, 0
    %978 = vmatpush.msra.mxu0 0.0
    %979 = vmatpush.msra.mxu0 0.0
    %980 = vmatpush.msra.mxu0 0.0
    %981 = vmatpush.msra.mxu0 0.0
    %982 = vmatpush.msra.mxu0 0.0
    %983 = vmatpush.msra.mxu0 0.0
    %984 = vmatpush.msra.mxu0 0.0
    %985 = vmatpush.msra.mxu0 0.0
    %986 = vmatpush.msra.mxu0 %v669
    %987 = vmatpush.msra.mxu0 %v667
    %988 = vmatpush.msra.mxu0 %v665
    %989 = vmatpush.msra.mxu0 %v663
    %990 = vmatpush.msra.mxu0 %v661
    %991 = vmatpush.msra.mxu0 %v659
    %992 = vmatpush.msra.mxu0 %v657
    %993 = vmatpush.msra.mxu0 %v655
    %994 = vmatmul.f32.gmra.mxu0 %v976
    %v995 = vpop.f32.mrf.mxu0
    %v996 = vadd.f32 0.0, %v995
    %997 = vdwg.mxu0
    %998 = vmatpush.msra.mxu0 0.0
    %999 = vmatpush.msra.mxu0 0.0
    %1000 = vmatpush.msra.mxu0 0.0
    %1001 = vmatpush.msra.mxu0 0.0
    %1002 = vmatpush.msra.mxu0 0.0
    %1003 = vmatpush.msra.mxu0 0.0
    %1004 = vmatpush.msra.mxu0 0.0
    %1005 = vmatpush.msra.mxu0 0.0
    %1006 = vmatpush.msra.mxu0 %v670
    %1007 = vmatpush.msra.mxu0 %v668
    %1008 = vmatpush.msra.mxu0 %v666
    %1009 = vmatpush.msra.mxu0 %v664
    %1010 = vmatpush.msra.mxu0 %v662
    %1011 = vmatpush.msra.mxu0 %v660
    %1012 = vmatpush.msra.mxu0 %v658
    %1013 = vmatpush.msra.mxu0 %v656
    %1014 = vmatmul.f32.gmra.mxu0 %v976
    %v1015 = vpop.f32.mrf.mxu0
    %v1016 = vadd.f32 0.0, %v1015
    %1017 = vdwg.mxu0
    %v1018 = vadd.f32 %v971, %v996
    %v1019 = vadd.f32 %v972, %v1016
    %v1020 = vxor.u32 %v1018, 2147483648
    %v1021 = vmul.f32 %v1020, 1.442695
    %v1022 = vpow.pop %v1021
    %v1023 = vadd.f32 %v1022, 1.0
    %v1024 = vrcp.pop %v1023
    %v1025 = vmul.f32 %v1023, %v1024
    %v1026 = vsub.f32 1.0, %v1025
    %v1027 = vmul.f32 %v1024, %v1026
    %v1028 = vadd.f32 %v1024, %v1027
    %vm1029 = vweird.f32 %v1023
    %vm1030 = vweird.f32 %v1024
    %vm1031 = vmor %vm1029, %vm1030
    %v1032 = vsel %vm1031, %v1024, %v1028
    %v1033 = vand.u32 2147483647, %v1023
    %vm1034 = vcmp.eq.f32.partialorder %v1033, 8.507059e+37
    %v1035 = vand.u32 %v1023, 2147483648
    %v1036 = vor.u32 1.1754944e-38, %v1035
    %v1037 = vsel %vm1034, %v1036, %v1032
    %v1038 = vmul.f32 1.0, %v1037
    %v1039 = vtanh.pop %v1019
    %v1040 = vxor.u32 %v1019, 2147483648
    %v1041 = vmul.f32 %v1040, 1.442695
    %v1042 = vpow.pop %v1041
    %v1043 = vadd.f32 %v1042, 1.0
    %v1044 = vrcp.pop %v1043
    %v1045 = vmul.f32 %v1043, %v1044
    %v1046 = vsub.f32 1.0, %v1045
    %v1047 = vmul.f32 %v1044, %v1046
    %v1048 = vadd.f32 %v1044, %v1047
    %vm1049 = vweird.f32 %v1043
    %vm1050 = vweird.f32 %v1044
    %vm1051 = vmor %vm1049, %vm1050
    %v1052 = vsel %vm1051, %v1044, %v1048
    %v1053 = vand.u32 2147483647, %v1043
    %vm1054 = vcmp.eq.f32.partialorder %v1053, 8.507059e+37
    %v1055 = vand.u32 %v1043, 2147483648
    %v1056 = vor.u32 1.1754944e-38, %v1055
    %v1057 = vsel %vm1054, %v1056, %v1052
    %v1058 = vmul.f32 1.0, %v1057
    %v1059 = vmul.f32 %v1038, %v965
    %v1060 = vmul.f32 %v1038, %v1039
    %1062 = vrot.lane.b32.xlu0 %v1060, 64
    %v1063 = vpop.permute.xlu0 %1062
    %v1065 = vadd.f32 %v1059, %v1063
    %v1066 = vtanh.pop %v1065
    %v1067 = vmul.f32 %v1058, %v1066
    %s1068 = smul.u32 4, 2
    %s1069 = smul.addr %s1068, 8
    %s1070 = scalar_lea.vmem [#allocation2], %s1069
    %v1071 = vld [vmem:[%s1070] sm:$0xff]
    %v1072 = vld [vmem:[%s1070 + $0x8] sm:$0xff]
    %1074 = vrot.lane.b32.xlu0 %v1067, 64
    %v1075 = vpop.permute.xlu0 %1074
    %v1076 = vsel %vm134, %v1075, 0
    %1078 = vmatpush.msra.mxu0 0.0
    %1079 = vmatpush.msra.mxu0 0.0
    %1080 = vmatpush.msra.mxu0 0.0
    %1081 = vmatpush.msra.mxu0 0.0
    %1082 = vmatpush.msra.mxu0 0.0
    %1083 = vmatpush.msra.mxu0 0.0
    %1084 = vmatpush.msra.mxu0 0.0
    %1085 = vmatpush.msra.mxu0 0.0
    %1086 = vmatpush.msra.mxu0 %v669
    %1087 = vmatpush.msra.mxu0 %v667
    %1088 = vmatpush.msra.mxu0 %v665
    %1089 = vmatpush.msra.mxu0 %v663
    %1090 = vmatpush.msra.mxu0 %v661
    %1091 = vmatpush.msra.mxu0 %v659
    %1092 = vmatpush.msra.mxu0 %v657
    %1093 = vmatpush.msra.mxu0 %v655
    %1094 = vmatmul.f32.gmra.mxu0 %v1076
    %v1095 = vpop.f32.mrf.mxu0
    %v1096 = vadd.f32 0.0, %v1095
    %1097 = vdwg.mxu0
    %1098 = vmatpush.msra.mxu0 0.0
    %1099 = vmatpush.msra.mxu0 0.0
    %1100 = vmatpush.msra.mxu0 0.0
    %1101 = vmatpush.msra.mxu0 0.0
    %1102 = vmatpush.msra.mxu0 0.0
    %1103 = vmatpush.msra.mxu0 0.0
    %1104 = vmatpush.msra.mxu0 0.0
    %1105 = vmatpush.msra.mxu0 0.0
    %1106 = vmatpush.msra.mxu0 %v670
    %1107 = vmatpush.msra.mxu0 %v668
    %1108 = vmatpush.msra.mxu0 %v666
    %1109 = vmatpush.msra.mxu0 %v664
    %1110 = vmatpush.msra.mxu0 %v662
    %1111 = vmatpush.msra.mxu0 %v660
    %1112 = vmatpush.msra.mxu0 %v658
    %1113 = vmatpush.msra.mxu0 %v656
    %1114 = vmatmul.f32.gmra.mxu0 %v1076
    %v1115 = vpop.f32.mrf.mxu0
    %v1116 = vadd.f32 0.0, %v1115
    %1117 = vdwg.mxu0
    %v1118 = vadd.f32 %v1071, %v1096
    %v1119 = vadd.f32 %v1072, %v1116
    %v1120 = vxor.u32 %v1118, 2147483648
    %v1121 = vmul.f32 %v1120, 1.442695
    %v1122 = vpow.pop %v1121
    %v1123 = vadd.f32 %v1122, 1.0
    %v1124 = vrcp.pop %v1123
    %v1125 = vmul.f32 %v1123, %v1124
    %v1126 = vsub.f32 1.0, %v1125
    %v1127 = vmul.f32 %v1124, %v1126
    %v1128 = vadd.f32 %v1124, %v1127
    %vm1129 = vweird.f32 %v1123
    %vm1130 = vweird.f32 %v1124
    %vm1131 = vmor %vm1129, %vm1130
    %v1132 = vsel %vm1131, %v1124, %v1128
    %v1133 = vand.u32 2147483647, %v1123
    %vm1134 = vcmp.eq.f32.partialorder %v1133, 8.507059e+37
    %v1135 = vand.u32 %v1123, 2147483648
    %v1136 = vor.u32 1.1754944e-38, %v1135
    %v1137 = vsel %vm1134, %v1136, %v1132
    %v1138 = vmul.f32 1.0, %v1137
    %v1139 = vtanh.pop %v1119
    %v1140 = vxor.u32 %v1119, 2147483648
    %v1141 = vmul.f32 %v1140, 1.442695
    %v1142 = vpow.pop %v1141
    %v1143 = vadd.f32 %v1142, 1.0
    %v1144 = vrcp.pop %v1143
    %v1145 = vmul.f32 %v1143, %v1144
    %v1146 = vsub.f32 1.0, %v1145
    %v1147 = vmul.f32 %v1144, %v1146
    %v1148 = vadd.f32 %v1144, %v1147
    %vm1149 = vweird.f32 %v1143
    %vm1150 = vweird.f32 %v1144
    %vm1151 = vmor %vm1149, %vm1150
    %v1152 = vsel %vm1151, %v1144, %v1148
    %v1153 = vand.u32 2147483647, %v1143
    %vm1154 = vcmp.eq.f32.partialorder %v1153, 8.507059e+37
    %v1155 = vand.u32 %v1143, 2147483648
    %v1156 = vor.u32 1.1754944e-38, %v1155
    %v1157 = vsel %vm1154, %v1156, %v1152
    %v1158 = vmul.f32 1.0, %v1157
    %v1159 = vmul.f32 %v1138, %v1065
    %v1160 = vmul.f32 %v1138, %v1139
    %1162 = vrot.lane.b32.xlu0 %v1160, 64
    %v1163 = vpop.permute.xlu0 %1162
    %v1165 = vadd.f32 %v1159, %v1163
    %v1166 = vtanh.pop %v1165
    %v1167 = vmul.f32 %v1158, %v1166
    %s1168 = smul.u32 5, 2
    %s1169 = smul.addr %s1168, 8
    %s1170 = scalar_lea.vmem [#allocation2], %s1169
    %v1171 = vld [vmem:[%s1170] sm:$0xff]
    %v1172 = vld [vmem:[%s1170 + $0x8] sm:$0xff]
    %1174 = vrot.lane.b32.xlu0 %v1167, 64
    %v1175 = vpop.permute.xlu0 %1174
    %v1176 = vsel %vm134, %v1175, 0
    %1178 = vmatpush.msra.mxu0 0.0
    %1179 = vmatpush.msra.mxu0 0.0
    %1180 = vmatpush.msra.mxu0 0.0
    %1181 = vmatpush.msra.mxu0 0.0
    %1182 = vmatpush.msra.mxu0 0.0
    %1183 = vmatpush.msra.mxu0 0.0
    %1184 = vmatpush.msra.mxu0 0.0
    %1185 = vmatpush.msra.mxu0 0.0
    %1186 = vmatpush.msra.mxu0 %v669
    %1187 = vmatpush.msra.mxu0 %v667
    %1188 = vmatpush.msra.mxu0 %v665
    %1189 = vmatpush.msra.mxu0 %v663
    %1190 = vmatpush.msra.mxu0 %v661
    %1191 = vmatpush.msra.mxu0 %v659
    %1192 = vmatpush.msra.mxu0 %v657
    %1193 = vmatpush.msra.mxu0 %v655
    %1194 = vmatmul.f32.gmra.mxu0 %v1176
    %v1195 = vpop.f32.mrf.mxu0
    %v1196 = vadd.f32 0.0, %v1195
    %1197 = vdwg.mxu0
    %1198 = vmatpush.msra.mxu0 0.0
    %1199 = vmatpush.msra.mxu0 0.0
    %1200 = vmatpush.msra.mxu0 0.0
    %1201 = vmatpush.msra.mxu0 0.0
    %1202 = vmatpush.msra.mxu0 0.0
    %1203 = vmatpush.msra.mxu0 0.0
    %1204 = vmatpush.msra.mxu0 0.0
    %1205 = vmatpush.msra.mxu0 0.0
    %1206 = vmatpush.msra.mxu0 %v670
    %1207 = vmatpush.msra.mxu0 %v668
    %1208 = vmatpush.msra.mxu0 %v666
    %1209 = vmatpush.msra.mxu0 %v664
    %1210 = vmatpush.msra.mxu0 %v662
    %1211 = vmatpush.msra.mxu0 %v660
    %1212 = vmatpush.msra.mxu0 %v658
    %1213 = vmatpush.msra.mxu0 %v656
    %1214 = vmatmul.f32.gmra.mxu0 %v1176
    %v1215 = vpop.f32.mrf.mxu0
    %v1216 = vadd.f32 0.0, %v1215
    %1217 = vdwg.mxu0
    %v1218 = vadd.f32 %v1171, %v1196
    %v1219 = vadd.f32 %v1172, %v1216
    %v1220 = vxor.u32 %v1218, 2147483648
    %v1221 = vmul.f32 %v1220, 1.442695
    %v1222 = vpow.pop %v1221
    %v1223 = vadd.f32 %v1222, 1.0
    %v1224 = vrcp.pop %v1223
    %v1225 = vmul.f32 %v1223, %v1224
    %v1226 = vsub.f32 1.0, %v1225
    %v1227 = vmul.f32 %v1224, %v1226
    %v1228 = vadd.f32 %v1224, %v1227
    %vm1229 = vweird.f32 %v1223
    %vm1230 = vweird.f32 %v1224
    %vm1231 = vmor %vm1229, %vm1230
    %v1232 = vsel %vm1231, %v1224, %v1228
    %v1233 = vand.u32 2147483647, %v1223
    %vm1234 = vcmp.eq.f32.partialorder %v1233, 8.507059e+37
    %v1235 = vand.u32 %v1223, 2147483648
    %v1236 = vor.u32 1.1754944e-38, %v1235
    %v1237 = vsel %vm1234, %v1236, %v1232
    %v1238 = vmul.f32 1.0, %v1237
    %v1239 = vtanh.pop %v1219
    %v1240 = vxor.u32 %v1219, 2147483648
    %v1241 = vmul.f32 %v1240, 1.442695
    %v1242 = vpow.pop %v1241
    %v1243 = vadd.f32 %v1242, 1.0
    %v1244 = vrcp.pop %v1243
    %v1245 = vmul.f32 %v1243, %v1244
    %v1246 = vsub.f32 1.0, %v1245
    %v1247 = vmul.f32 %v1244, %v1246
    %v1248 = vadd.f32 %v1244, %v1247
    %vm1249 = vweird.f32 %v1243
    %vm1250 = vweird.f32 %v1244
    %vm1251 = vmor %vm1249, %vm1250
    %v1252 = vsel %vm1251, %v1244, %v1248
    %v1253 = vand.u32 2147483647, %v1243
    %vm1254 = vcmp.eq.f32.partialorder %v1253, 8.507059e+37
    %v1255 = vand.u32 %v1243, 2147483648
    %v1256 = vor.u32 1.1754944e-38, %v1255
    %v1257 = vsel %vm1254, %v1256, %v1252
    %v1258 = vmul.f32 1.0, %v1257
    %v1259 = vmul.f32 %v1238, %v1165
    %v1260 = vmul.f32 %v1238, %v1239
    %1262 = vrot.lane.b32.xlu0 %v1260, 64
    %v1263 = vpop.permute.xlu0 %1262
    %v1265 = vadd.f32 %v1259, %v1263
    %v1266 = vtanh.pop %v1265
    %v1267 = vmul.f32 %v1258, %v1266
    %s1268 = smul.u32 6, 2
    %s1269 = smul.addr %s1268, 8
    %s1270 = scalar_lea.vmem [#allocation2], %s1269
    %v1271 = vld [vmem:[%s1270] sm:$0xff]
    %v1272 = vld [vmem:[%s1270 + $0x8] sm:$0xff]
    %1274 = vrot.lane.b32.xlu0 %v1267, 64
    %v1275 = vpop.permute.xlu0 %1274
    %v1276 = vsel %vm134, %v1275, 0
    %1278 = vmatpush.msra.mxu0 0.0
    %1279 = vmatpush.msra.mxu0 0.0
    %1280 = vmatpush.msra.mxu0 0.0
    %1281 = vmatpush.msra.mxu0 0.0
    %1282 = vmatpush.msra.mxu0 0.0
    %1283 = vmatpush.msra.mxu0 0.0
    %1284 = vmatpush.msra.mxu0 0.0
    %1285 = vmatpush.msra.mxu0 0.0
    %1286 = vmatpush.msra.mxu0 %v669
    %1287 = vmatpush.msra.mxu0 %v667
    %1288 = vmatpush.msra.mxu0 %v665
    %1289 = vmatpush.msra.mxu0 %v663
    %1290 = vmatpush.msra.mxu0 %v661
    %1291 = vmatpush.msra.mxu0 %v659
    %1292 = vmatpush.msra.mxu0 %v657
    %1293 = vmatpush.msra.mxu0 %v655
    %1294 = vmatmul.f32.gmra.mxu0 %v1276
    %v1295 = vpop.f32.mrf.mxu0
    %v1296 = vadd.f32 0.0, %v1295
    %1297 = vdwg.mxu0
    %1298 = vmatpush.msra.mxu0 0.0
    %1299 = vmatpush.msra.mxu0 0.0
    %1300 = vmatpush.msra.mxu0 0.0
    %1301 = vmatpush.msra.mxu0 0.0
    %1302 = vmatpush.msra.mxu0 0.0
    %1303 = vmatpush.msra.mxu0 0.0
    %1304 = vmatpush.msra.mxu0 0.0
    %1305 = vmatpush.msra.mxu0 0.0
    %1306 = vmatpush.msra.mxu0 %v670
    %1307 = vmatpush.msra.mxu0 %v668
    %1308 = vmatpush.msra.mxu0 %v666
    %1309 = vmatpush.msra.mxu0 %v664
    %1310 = vmatpush.msra.mxu0 %v662
    %1311 = vmatpush.msra.mxu0 %v660
    %1312 = vmatpush.msra.mxu0 %v658
    %1313 = vmatpush.msra.mxu0 %v656
    %1314 = vmatmul.f32.gmra.mxu0 %v1276
    %v1315 = vpop.f32.mrf.mxu0
    %v1316 = vadd.f32 0.0, %v1315
    %1317 = vdwg.mxu0
    %v1318 = vadd.f32 %v1271, %v1296
    %v1319 = vadd.f32 %v1272, %v1316
    %v1320 = vxor.u32 %v1318, 2147483648
    %v1321 = vmul.f32 %v1320, 1.442695
    %v1322 = vpow.pop %v1321
    %v1323 = vadd.f32 %v1322, 1.0
    %v1324 = vrcp.pop %v1323
    %v1325 = vmul.f32 %v1323, %v1324
    %v1326 = vsub.f32 1.0, %v1325
    %v1327 = vmul.f32 %v1324, %v1326
    %v1328 = vadd.f32 %v1324, %v1327
    %vm1329 = vweird.f32 %v1323
    %vm1330 = vweird.f32 %v1324
    %vm1331 = vmor %vm1329, %vm1330
    %v1332 = vsel %vm1331, %v1324, %v1328
    %v1333 = vand.u32 2147483647, %v1323
    %vm1334 = vcmp.eq.f32.partialorder %v1333, 8.507059e+37
    %v1335 = vand.u32 %v1323, 2147483648
    %v1336 = vor.u32 1.1754944e-38, %v1335
    %v1337 = vsel %vm1334, %v1336, %v1332
    %v1338 = vmul.f32 1.0, %v1337
    %v1339 = vtanh.pop %v1319
    %v1340 = vxor.u32 %v1319, 2147483648
    %v1341 = vmul.f32 %v1340, 1.442695
    %v1342 = vpow.pop %v1341
    %v1343 = vadd.f32 %v1342, 1.0
    %v1344 = vrcp.pop %v1343
    %v1345 = vmul.f32 %v1343, %v1344
    %v1346 = vsub.f32 1.0, %v1345
    %v1347 = vmul.f32 %v1344, %v1346
    %v1348 = vadd.f32 %v1344, %v1347
    %vm1349 = vweird.f32 %v1343
    %vm1350 = vweird.f32 %v1344
    %vm1351 = vmor %vm1349, %vm1350
    %v1352 = vsel %vm1351, %v1344, %v1348
    %v1353 = vand.u32 2147483647, %v1343
    %vm1354 = vcmp.eq.f32.partialorder %v1353, 8.507059e+37
    %v1355 = vand.u32 %v1343, 2147483648
    %v1356 = vor.u32 1.1754944e-38, %v1355
    %v1357 = vsel %vm1354, %v1356, %v1352
    %v1358 = vmul.f32 1.0, %v1357
    %v1359 = vmul.f32 %v1338, %v1265
    %v1360 = vmul.f32 %v1338, %v1339
    %1362 = vrot.lane.b32.xlu0 %v1360, 64
    %v1363 = vpop.permute.xlu0 %1362
    %v1365 = vadd.f32 %v1359, %v1363
    %v1366 = vtanh.pop %v1365
    %v1367 = vmul.f32 %v1358, %v1366
    %s1368 = smul.u32 7, 2
    %s1369 = smul.addr %s1368, 8
    %s1370 = scalar_lea.vmem [#allocation2], %s1369
    %v1371 = vld [vmem:[%s1370] sm:$0xff]
    %v1372 = vld [vmem:[%s1370 + $0x8] sm:$0xff]
    %1374 = vrot.lane.b32.xlu0 %v1367, 64
    %v1375 = vpop.permute.xlu0 %1374
    %v1376 = vsel %vm134, %v1375, 0
    %1378 = vmatpush.msra.mxu0 0.0
    %1379 = vmatpush.msra.mxu0 0.0
    %1380 = vmatpush.msra.mxu0 0.0
    %1381 = vmatpush.msra.mxu0 0.0
    %1382 = vmatpush.msra.mxu0 0.0
    %1383 = vmatpush.msra.mxu0 0.0
    %1384 = vmatpush.msra.mxu0 0.0
    %1385 = vmatpush.msra.mxu0 0.0
    %1386 = vmatpush.msra.mxu0 %v669
    %1387 = vmatpush.msra.mxu0 %v667
    %1388 = vmatpush.msra.mxu0 %v665
    %1389 = vmatpush.msra.mxu0 %v663
    %1390 = vmatpush.msra.mxu0 %v661
    %1391 = vmatpush.msra.mxu0 %v659
    %1392 = vmatpush.msra.mxu0 %v657
    %1393 = vmatpush.msra.mxu0 %v655
    %1394 = vmatmul.f32.gmra.mxu0 %v1376
    %v1395 = vpop.f32.mrf.mxu0
    %v1396 = vadd.f32 0.0, %v1395
    %1397 = vdwg.mxu0
    %1398 = vmatpush.msra.mxu0 0.0
    %1399 = vmatpush.msra.mxu0 0.0
    %1400 = vmatpush.msra.mxu0 0.0
    %1401 = vmatpush.msra.mxu0 0.0
    %1402 = vmatpush.msra.mxu0 0.0
    %1403 = vmatpush.msra.mxu0 0.0
    %1404 = vmatpush.msra.mxu0 0.0
    %1405 = vmatpush.msra.mxu0 0.0
    %1406 = vmatpush.msra.mxu0 %v670
    %1407 = vmatpush.msra.mxu0 %v668
    %1408 = vmatpush.msra.mxu0 %v666
    %1409 = vmatpush.msra.mxu0 %v664
    %1410 = vmatpush.msra.mxu0 %v662
    %1411 = vmatpush.msra.mxu0 %v660
    %1412 = vmatpush.msra.mxu0 %v658
    %1413 = vmatpush.msra.mxu0 %v656
    %1414 = vmatmul.f32.gmra.mxu0 %v1376
    %v1415 = vpop.f32.mrf.mxu0
    %v1416 = vadd.f32 0.0, %v1415
    %1417 = vdwg.mxu0
    %v1418 = vadd.f32 %v1371, %v1396
    %v1419 = vadd.f32 %v1372, %v1416
    %v1420 = vxor.u32 %v1418, 2147483648
    %v1421 = vmul.f32 %v1420, 1.442695
    %v1422 = vpow.pop %v1421
    %v1423 = vadd.f32 %v1422, 1.0
    %v1424 = vrcp.pop %v1423
    %v1425 = vmul.f32 %v1423, %v1424
    %v1426 = vsub.f32 1.0, %v1425
    %v1427 = vmul.f32 %v1424, %v1426
    %v1428 = vadd.f32 %v1424, %v1427
    %vm1429 = vweird.f32 %v1423
    %vm1430 = vweird.f32 %v1424
    %vm1431 = vmor %vm1429, %vm1430
    %v1432 = vsel %vm1431, %v1424, %v1428
    %v1433 = vand.u32 2147483647, %v1423
    %vm1434 = vcmp.eq.f32.partialorder %v1433, 8.507059e+37
    %v1435 = vand.u32 %v1423, 2147483648
    %v1436 = vor.u32 1.1754944e-38, %v1435
    %v1437 = vsel %vm1434, %v1436, %v1432
    %v1438 = vmul.f32 1.0, %v1437
    %v1439 = vtanh.pop %v1419
    %v1440 = vxor.u32 %v1419, 2147483648
    %v1441 = vmul.f32 %v1440, 1.442695
    %v1442 = vpow.pop %v1441
    %v1443 = vadd.f32 %v1442, 1.0
    %v1444 = vrcp.pop %v1443
    %v1445 = vmul.f32 %v1443, %v1444
    %v1446 = vsub.f32 1.0, %v1445
    %v1447 = vmul.f32 %v1444, %v1446
    %v1448 = vadd.f32 %v1444, %v1447
    %vm1449 = vweird.f32 %v1443
    %vm1450 = vweird.f32 %v1444
    %vm1451 = vmor %vm1449, %vm1450
    %v1452 = vsel %vm1451, %v1444, %v1448
    %v1453 = vand.u32 2147483647, %v1443
    %vm1454 = vcmp.eq.f32.partialorder %v1453, 8.507059e+37
    %v1455 = vand.u32 %v1443, 2147483648
    %v1456 = vor.u32 1.1754944e-38, %v1455
    %v1457 = vsel %vm1454, %v1456, %v1452
    %v1458 = vmul.f32 1.0, %v1457
    %v1459 = vmul.f32 %v1438, %v1365
    %v1460 = vmul.f32 %v1438, %v1439
    %1462 = vrot.lane.b32.xlu0 %v1460, 64
    %v1463 = vpop.permute.xlu0 %1462
    %v1465 = vadd.f32 %v1459, %v1463
    %v1466 = vtanh.pop %v1465
    %v1467 = vmul.f32 %v1458, %v1466
    %1469 = vrot.lane.b32.xlu0 %v1467, 64
    %v1470 = vpop.permute.xlu0 %1469
    %1472 = vst.msk [vmem:[#allocation3] sm:$0xff] %vm134, %v1470
    %1474 = vrot.lane.b32.xlu0 %v1465, 64
    %v1475 = vpop.permute.xlu0 %1474
    %1477 = vst.msk [vmem:[#allocation4] sm:$0xff] %vm134, %v1475
    // Predicated region
    $region54: #{tpu_custom_call.1} parent=1 // pred_check
      %p1478 = pneg %p83
    $region55: #{tpu_custom_call.1} parent=1 // pred_check_branch
      %1480 = sbr.rel (%p1478) target = $region57
    $region56: #{tpu_custom_call.1} parent=1 // pred_region
      %v1481 = vld [vmem:[#allocation7] sm:$0xff]
      %v1482 = vld [vmem:[#allocation6] sm:$0xff]
      %1484 = vset.pattern.permute.xlu0 0
      %1485 = vperm.xlu0 %1484, %v1482
      %v1486 = vpop.permute.xlu0 %1485
      %v1488 = vrcp.pop %v1486
      %v1489 = vmul.f32 %v1486, %v1488
      %v1490 = vsub.f32 1.0, %v1489
      %v1491 = vmul.f32 %v1488, %v1490
      %v1492 = vadd.f32 %v1488, %v1491
      %vm1493 = vweird.f32 %v1486
      %vm1494 = vweird.f32 %v1488
      %vm1495 = vmor %vm1493, %vm1494
      %v1496 = vsel %vm1495, %v1488, %v1492
      %v1497 = vand.u32 2147483647, %v1486
      %vm1498 = vcmp.eq.f32.partialorder %v1497, 8.507059e+37
      %v1499 = vand.u32 %v1486, 2147483648
      %v1500 = vor.u32 1.1754944e-38, %v1499
      %v1501 = vsel %vm1498, %v1500, %v1496
      %v1502 = vmul.f32 %v1481, %v1501
      %v1503 = vld [vmem:[#allocation3] sm:$0xff]
      %v1504 = vld [vmem:[%s6] sm:$0x1]
      %v1506 = vperm.slane %v1504, 0
      %v1508 = vmul.f32 %v1503, %v1506
      %v1509 = vsel %vm134, %v1508, 0.0
      %1510 = vadd.xlane.f32.xlu0 %v1509
      %v1511 = vpop.xlane.xlu0 %1510
      %v1512 = vld [vmem:[%s7] sm:$0x1]
      %v1514 = vperm.slane %v1512, 0
      %v1516 = vmul.f32 %v1502, %v1514
      %v1517 = vsel %vm134, %v1516, 0.0
      %1518 = vadd.xlane.f32.xlu0 %v1517
      %v1519 = vpop.xlane.xlu0 %1518
      %v1520 = vadd.f32 %v1511, %v1519
      %v1521 = vld [vmem:[#allocation9] sm:$0x1]
      %v1523 = vperm.slane %v1521, 0
      %v1525 = vadd.f32 %v1520, %v1523
      %1526 = vst.msk [vmem:[%s9] sm:$0xff] %vm507, %v1525
    $region57: #{tpu_custom_call.1} parent=1 // pred_fallthru
      _
    // Predicated region
    $region58: #{tpu_custom_call.1} parent=1 // pred_check
      _
    $region59: #{tpu_custom_call.1} parent=1 // pred_check_branch
      %1528 = sbr.rel (0) target = $region61
    $region60: #{tpu_custom_call.1} parent=1 // pred_region
      _
    $region61: #{tpu_custom_call.1} parent=1 // pred_fallthru
      _
    // Predicated region
    $region62: #{tpu_custom_call.1} parent=1 // pred_check
      _
    $region63: #{tpu_custom_call.1} parent=1 // pred_check_branch
      %1530 = sbr.rel (0) target = $region65
    $region64: #{tpu_custom_call.1} parent=1 // pred_region
      _
    $region65: #{tpu_custom_call.1} parent=1 // pred_fallthru
      _
    %1531 = vsyncpa [#allocation11], 1
    %1532 = vsyncpa [#allocation13], 1

</llo_original>
